<compile_context>
chip_gen: v7x
topology: tpu7x:2x2x1
jax: 0.10.0
libtpu: 0.0.40
codegen_flags: <defaults>
</compile_context>

<pallas_src>
import numpy as np
import jax
import jax.numpy as jnp
from jax.experimental import pallas as pl
from jax.experimental.pallas import tpu as pltpu

NPAD = 128       # lane-padded samples per loss problem
B_TILE = 8       # loss problems per grid step (multiple of 8 sublanes).
                 # Raise towards 128-256 on v6e/v7x to fill the 256-wide MXU;
                 # watch the (b_tile, NPAD, NPAD) f32 intermediate vs VMEM.
PAD_NEG = -1e9       # yhat fill on padding lanes/rows -> exp underflows to 0
PAD_DETECT = -1e8    # anything below this is treated as padding in-kernel
PAD_TIME = -1.0      # |y| sentinel on padding (real times are >= 0)


def surv_loss_kernel(tri_ref, yhat_ref, y_ref, tcol_ref, out_ref):
    yhat = yhat_ref[...]          # (B, N) risk scores; padding lanes = PAD_NEG
    y = y_ref[...]                # (B, N) signed labels; padding lanes = 0
    tcol = tcol_ref[...]          # (B, N, 1) |y| with -1 sentinel on padding

    # Event indicator (sign(Y) > 0). Padding lanes (y == 0) give E = 0.
    E = jnp.where(y > 0.0, 1.0, 0.0)
    # Row view of |y| with the same -1 sentinel on padding lanes; padding is
    # identified via the PAD_NEG fill of yhat (real scores are >> PAD_DETECT).
    trow = jnp.where(yhat > PAD_DETECT, jnp.abs(y), PAD_TIME)

    # Numerically stable hazard ratios: exp(yhat - m); m is added back below.
    m = jnp.max(yhat, axis=1, keepdims=True)                 # (B, 1)
    hr = jnp.exp(yhat - m)                                   # padding -> 0

    # Inclusive prefix sum along lanes on the MXU:
    #   cexp[b, i] = sum_{j <= i} hr[b, j] = (hr @ triu_ones)[b, i]
    # Split hr into a bf16-representable head + f32 residual so the two
    # default-precision MXU passes give ~f32 accuracy (tri is 0/1, bf16-exact).
    tri = tri_ref[...]
    hr_hi = hr.astype(jnp.bfloat16).astype(jnp.float32)
    hr_lo = hr - hr_hi
    cexp = (jnp.dot(hr_hi, tri, preferred_element_type=jnp.float32) +
            jnp.dot(hr_lo, tri, preferred_element_type=jnp.float32))
    logcum = jnp.log(cexp) + m                               # (B, N)

    # Per-sample segment max over tied times. Reduce over the lane axis so
    # logcum broadcasts as a row (no relayout). Padding columns carry
    # trow = -1 and only ever match padding rows, whose E is 0.
    eq = tcol == trow[:, None, :]                            # (B, N, N)
    seg_vals = jnp.where(eq, logcum[:, None, :], -jnp.inf)   # fused broadcast
    seg_max = jnp.maximum(jnp.max(seg_vals, axis=-1), 0.0)   # zero-init clamp

    loss_s2 = jnp.sum(E * seg_max, axis=1, keepdims=True)    # (B, 1)
    loss_s1 = jnp.sum(E * yhat, axis=1, keepdims=True)       # (B, 1)
    obs = jnp.sum(E, axis=1, keepdims=True)                  # (B, 1)
    # NOTE: obs == 0 (no observed events) yields NaN, same as the reference's
    # 0/0; padded batch rows hit this and are sliced off by the wrapper.
    out_ref[...] = (loss_s2 - loss_s1) / obs


def surv_loss_batched(yhat, y, *, npad=NPAD, b_tile=B_TILE):
    """Batched DeepSurv loss. yhat, y: (B, n) or (B, n, 1) -> (B,) losses."""
    yh = jnp.asarray(yhat, jnp.float32).reshape(jnp.shape(yhat)[0], -1)
    yv = jnp.asarray(y, jnp.float32).reshape(jnp.shape(y)[0], -1)
    B, n = yh.shape
    assert yv.shape == (B, n)
    assert n <= npad, "number of samples larger than padded lane width"
    b_pad = ((B + b_tile - 1) // b_tile) * b_tile

    yh_p = jnp.full((b_pad, npad), PAD_NEG, jnp.float32).at[:B, :n].set(yh)
    y_p = jnp.zeros((b_pad, npad), jnp.float32).at[:B, :n].set(yv)
    tcol = jnp.full((b_pad, npad), PAD_TIME, jnp.float32).at[:B, :n].set(
        jnp.abs(yv))
    tcol = tcol[:, :, None]                                   # (b_pad, npad, 1)
    # tri[j, i] = 1 iff j <= i  =>  (hr @ tri)[b, i] = inclusive prefix sum.
    tri = jnp.triu(jnp.ones((npad, npad), jnp.float32))

    out = pl.pallas_call(
        surv_loss_kernel,
        out_shape=jax.ShapeDtypeStruct((b_pad, 1), jnp.float32),
        grid=(b_pad // b_tile,),
        in_specs=[
            pl.BlockSpec((npad, npad), lambda i: (0, 0)),          # tri, resident
            pl.BlockSpec((b_tile, npad), lambda i: (i, 0)),        # yhat
            pl.BlockSpec((b_tile, npad), lambda i: (i, 0)),        # y
            pl.BlockSpec((b_tile, npad, 1), lambda i: (i, 0, 0)),  # |y| column
        ],
        out_specs=pl.BlockSpec((b_tile, 1), lambda i: (i, 0)),
        compiler_params=pltpu.CompilerParams(
            dimension_semantics=("parallel",)),
    )(tri, yh_p, y_p, tcol)
    return out[:B, 0]


def surv_loss(yhat, y, **kwargs):
    """Single (Yhat, Y) pair, matching the PyTorch module's forward()."""
    return surv_loss_batched(jnp.reshape(yhat, (1, -1)),
                             jnp.reshape(y, (1, -1)), **kwargs)[0]


def surv_loss_reference(yhat, y):
    """Plain numpy transliteration of the PyTorch module (float64)."""
    yh = np.asarray(yhat, dtype=np.float64).reshape(-1)
    yv = np.asarray(y, dtype=np.float64).reshape(-1)
    E = (yv > 0).astype(np.float64)
    T = np.abs(yv)
    hr = np.exp(yh)
    cum = np.log(np.cumsum(hr))
    uniq, seg = [], []
    for t in T:
        if t not in uniq:
            uniq.append(t)
        seg.append(uniq.index(t))
    seg_max = np.zeros(len(uniq))
    for i, v in enumerate(cum):
        if v > seg_max[seg[i]]:
            seg_max[seg[i]] = v
    seg_sum = np.zeros(len(uniq))
    for i, e in enumerate(E):
        seg_sum[seg[i]] += e
    loss_s2 = np.sum(seg_max * seg_sum)
    loss_s1 = np.sum(yh * E)
    return (loss_s2 - loss_s1) / np.sum(E)


if __name__ == "__main__":
    key = jax.random.PRNGKey(0)
    B, N = 3, 8
    k1, k2, k3 = jax.random.split(key, 3)

    yhat = jax.random.normal(k1, (B, N), dtype=jnp.float32)
    # |Y| = event/censoring time (small ints so ties occur); sign(Y)>0 => event.
    times = jax.random.randint(k2, (B, N), 1, 5).astype(jnp.float32)
    signs = jnp.where(jax.random.bernoulli(k3, 0.7, (B, N)), 1.0, -1.0)
    signs = signs.at[:, 0].set(1.0)      # guarantee >= 1 observed event per row
    Y = times * signs

    losses = jax.block_until_ready(surv_loss_batched(yhat, Y))
    single = jax.block_until_ready(
        surv_loss(yhat[0].reshape(N, 1), Y[0].reshape(N, 1)))

    for b in range(B):
        ref = surv_loss_reference(np.asarray(yhat[b]), np.asarray(Y[b]))
        np.testing.assert_allclose(np.asarray(losses[b], np.float64), ref,
                                   rtol=1e-3, atol=1e-3)   # f32 kernel vs f64 ref
    np.testing.assert_allclose(np.asarray(single, np.float64),
                               np.asarray(losses[0], np.float64),
                               rtol=1e-5, atol=1e-5)
    print("KERNEL_OK")
</pallas_src>

<mosaic_0001>
module attributes {stable_mosaic.version = 11 : i64} {
  func.func @surv_loss_kernel(%arg0: i32, %arg1: memref<128x128xf32, #tpu.memory_space<vmem>>, %arg2: memref<8x128xf32, #tpu.memory_space<vmem>>, %arg3: memref<8x128xf32, #tpu.memory_space<vmem>>, %arg4: memref<8x128x1xf32, #tpu.memory_space<vmem>>, %arg5: memref<8x1xf32, #tpu.memory_space<vmem>>) attributes {dimension_semantics = [#tpu.dimension_semantics<parallel>], iteration_bounds = array<i64: 1>, scalar_prefetch = 0 : i64, scratch_operands = 0 : i64, tpu.core_type = #tpu.core_type<tc>, window_params = [{pipeline_mode = #tpu.pipeline_mode<synchronous>, transform_indices = @transform_0, window_bounds = array<i64: 128, 128>}, {transform_indices = @transform_1, window_bounds = array<i64: 8, 128>}, {transform_indices = @transform_2, window_bounds = array<i64: 8, 128>}, {transform_indices = @transform_3, window_bounds = array<i64: 8, 128, 1>}, {transform_indices = @transform_4, window_bounds = array<i64: 8, 1>}]} {
    %c0 = arith.constant 0 : index
    %c0_0 = arith.constant 0 : index
    %0 = vector.load %arg2[%c0, %c0_0] : memref<8x128xf32, #tpu.memory_space<vmem>>, vector<8x128xf32>
    %c0_1 = arith.constant 0 : index
    %c0_2 = arith.constant 0 : index
    %1 = vector.load %arg3[%c0_1, %c0_2] : memref<8x128xf32, #tpu.memory_space<vmem>>, vector<8x128xf32>
    %c0_3 = arith.constant 0 : index
    %c0_4 = arith.constant 0 : index
    %c0_5 = arith.constant 0 : index
    %2 = vector.load %arg4[%c0_3, %c0_4, %c0_5] : memref<8x128x1xf32, #tpu.memory_space<vmem>>, vector<8x128x1xf32>
    %cst = arith.constant 0.000000e+00 : f32
    %3 = vector.broadcast %cst : f32 to vector<8x128xf32>
    %4 = arith.cmpf ogt, %1, %3 : vector<8x128xf32>
    %cst_6 = arith.constant 1.000000e+00 : f32
    %cst_7 = arith.constant 0.000000e+00 : f32
    %5 = vector.broadcast %cst_6 : f32 to vector<8x128xf32>
    %6 = vector.broadcast %cst_7 : f32 to vector<8x128xf32>
    %7 = arith.select %4, %5, %6 : vector<8x128xi1>, vector<8x128xf32>
    %cst_8 = arith.constant -1.000000e+08 : f32
    %8 = vector.broadcast %cst_8 : f32 to vector<8x128xf32>
    %9 = arith.cmpf ogt, %0, %8 : vector<8x128xf32>
    %10 = math.absf %1 : vector<8x128xf32>
    %cst_9 = arith.constant -1.000000e+00 : f32
    %11 = vector.broadcast %cst_9 : f32 to vector<8x128xf32>
    %12 = arith.select %9, %10, %11 : vector<8x128xi1>, vector<8x128xf32>
    %cst_10 = arith.constant dense<0xFF800000> : vector<8xf32>
    %13 = vector.multi_reduction <maximumf>, %0, %cst_10 [1] : vector<8x128xf32> to vector<8xf32>
    %14 = vector.shape_cast %13 : vector<8xf32> to vector<8x1xf32>
    %15 = vector.broadcast %14 : vector<8x1xf32> to vector<8x128xf32>
    %16 = arith.subf %0, %15 : vector<8x128xf32>
    %17 = math.exp %16 : vector<8x128xf32>
    %c0_11 = arith.constant 0 : index
    %c0_12 = arith.constant 0 : index
    %18 = vector.load %arg1[%c0_11, %c0_12] : memref<128x128xf32, #tpu.memory_space<vmem>>, vector<128x128xf32>
    %19 = arith.truncf %17 : vector<8x128xf32> to vector<8x128xbf16>
    %20 = arith.extf %19 : vector<8x128xbf16> to vector<8x128xf32>
    %21 = arith.subf %17, %20 : vector<8x128xf32>
    %cst_13 = arith.constant dense<0.000000e+00> : vector<8x128xf32>
    %22 = tpu.matmul %20, %18, %cst_13 {dimension_numbers = #tpu.dot_dimension_numbers<[1], [0], [0], [1], [0, 0, 1, 1], [], []>} : vector<8x128xf32>, vector<128x128xf32>, vector<8x128xf32> -> vector<8x128xf32>
    %cst_14 = arith.constant dense<0.000000e+00> : vector<8x128xf32>
    %23 = tpu.matmul %21, %18, %cst_14 {dimension_numbers = #tpu.dot_dimension_numbers<[1], [0], [0], [1], [0, 0, 1, 1], [], []>} : vector<8x128xf32>, vector<128x128xf32>, vector<8x128xf32> -> vector<8x128xf32>
    %24 = arith.addf %22, %23 : vector<8x128xf32>
    %25 = math.log %24 : vector<8x128xf32>
    %26 = vector.broadcast %14 : vector<8x1xf32> to vector<8x128xf32>
    %27 = arith.addf %25, %26 : vector<8x128xf32>
    %28 = vector.shape_cast %12 : vector<8x128xf32> to vector<8x1x128xf32>
    %29 = vector.broadcast %2 : vector<8x128x1xf32> to vector<8x128x128xf32>
    %30 = vector.broadcast %28 : vector<8x1x128xf32> to vector<8x128x128xf32>
    %31 = arith.cmpf oeq, %29, %30 : vector<8x128x128xf32>
    %32 = vector.shape_cast %27 : vector<8x128xf32> to vector<8x1x128xf32>
    %cst_15 = arith.constant 0xFF800000 : f32
    %33 = vector.shape_cast %32 : vector<8x1x128xf32> to vector<8x1x128xf32>
    %34 = vector.broadcast %33 : vector<8x1x128xf32> to vector<8x128x128xf32>
    %35 = vector.broadcast %cst_15 : f32 to vector<8x128x128xf32>
    %36 = arith.select %31, %34, %35 : vector<8x128x128xi1>, vector<8x128x128xf32>
    %cst_16 = arith.constant dense<0xFF800000> : vector<8x128xf32>
    %37 = vector.multi_reduction <maximumf>, %36, %cst_16 [2] : vector<8x128x128xf32> to vector<8x128xf32>
    %cst_17 = arith.constant 0.000000e+00 : f32
    %38 = vector.broadcast %cst_17 : f32 to vector<8x128xf32>
    %39 = arith.maximumf %37, %38 : vector<8x128xf32>
    %40 = arith.mulf %7, %39 : vector<8x128xf32>
    %cst_18 = arith.constant dense<0.000000e+00> : vector<8xf32>
    %41 = vector.multi_reduction <add>, %40, %cst_18 [1] : vector<8x128xf32> to vector<8xf32>
    %42 = vector.shape_cast %41 : vector<8xf32> to vector<8x1xf32>
    %43 = arith.mulf %7, %0 : vector<8x128xf32>
    %cst_19 = arith.constant dense<0.000000e+00> : vector<8xf32>
    %44 = vector.multi_reduction <add>, %43, %cst_19 [1] : vector<8x128xf32> to vector<8xf32>
    %45 = vector.shape_cast %44 : vector<8xf32> to vector<8x1xf32>
    %cst_20 = arith.constant dense<0.000000e+00> : vector<8xf32>
    %46 = vector.multi_reduction <add>, %7, %cst_20 [1] : vector<8x128xf32> to vector<8xf32>
    %47 = vector.shape_cast %46 : vector<8xf32> to vector<8x1xf32>
    %48 = arith.subf %42, %45 : vector<8x1xf32>
    %49 = arith.divf %48, %47 : vector<8x1xf32>
    %c0_21 = arith.constant 0 : index
    %c0_22 = arith.constant 0 : index
    %50 = vector.load %arg5[%c0_21, %c0_22] : memref<8x1xf32, #tpu.memory_space<vmem>>, vector<8x1xf32>
    tpu.vector_store %arg5[%c0_21, %c0_22], %49 {strides = array<i32>} : memref<8x1xf32, #tpu.memory_space<vmem>>, vector<8x1xf32>,
    return
  }
  func.func @transform_0(%arg0: i32) -> (i32, i32) {
    %c0_i32 = arith.constant 0 : i32
    %c0_i32_0 = arith.constant 0 : i32
    %c0_i32_1 = arith.constant 0 : i32
    return %c0_i32, %c0_i32_0 : i32, i32
  }
  func.func @transform_1(%arg0: i32) -> (i32, i32) {
    %c0_i32 = arith.constant 0 : i32
    %c0_i32_0 = arith.constant 0 : i32
    return %arg0, %c0_i32 : i32, i32
  }
  func.func @transform_2(%arg0: i32) -> (i32, i32) {
    %c0_i32 = arith.constant 0 : i32
    %c0_i32_0 = arith.constant 0 : i32
    return %arg0, %c0_i32 : i32, i32
  }
  func.func @transform_3(%arg0: i32) -> (i32, i32, i32) {
    %c0_i32 = arith.constant 0 : i32
    %c0_i32_0 = arith.constant 0 : i32
    %c0_i32_1 = arith.constant 0 : i32
    return %arg0, %c0_i32, %c0_i32_0 : i32, i32, i32
  }
  func.func @transform_4(%arg0: i32) -> (i32, i32) {
    %c0_i32 = arith.constant 0 : i32
    %c0_i32_0 = arith.constant 0 : i32
    return %arg0, %c0_i32 : i32, i32
  }
}

</mosaic_0001>

<llo_original>
// kernel: tpu_custom_call.1
$region0: #{tpu_custom_call.1}
  #allocation0 [shape = 'u32[]', space=smem, size = 0x4, offset = 0x4, fixed_abs, tag = 'smem constant byte address 0x4 - core index']
  #allocation1 [shape = 'u32[144,128]{1,0:T(1,128)}', space=vmem, size = 0x12000, scoped, tag = 'internal scratch']
  %s0 = inlined_call_operand.vmem [shape: f32[128,128], index: 0, kind: input, shape index: {}]
  %s1 = inlined_call_operand.vmem [shape: f32[8,128], index: 1, kind: input, shape index: {}]
  %s2 = inlined_call_operand.vmem [shape: f32[8,128], index: 2, kind: input, shape index: {}]
  %s3 = inlined_call_operand.vmem [shape: f32[8,128,1], index: 3, kind: input, shape index: {}]
  %s4 = inlined_call_operand.vmem [shape: f32[8,1], index: 4, kind: output, shape index: {}]
  %s5 = sld [smem:[#allocation0]]
  $region26: #{tpu_custom_call.1} parent=0
    _
  %s7 = ssub.s32 1, %s5
  %s8 = scalar_select 0, %s7, %s5
  // Predicated region
  $region2: #{tpu_custom_call.1} parent=0 // pred_check
    _
  $region3: #{tpu_custom_call.1} parent=0 // pred_check_branch
    %10 = sbr.rel (0) target = $region5
  $region4: #{tpu_custom_call.1} parent=0 // pred_region
    _
  $region5: #{tpu_custom_call.1} parent=0 // pred_fallthru
    _
  // Predicated region
  $region6: #{tpu_custom_call.1} parent=0 // pred_check
    _
  $region7: #{tpu_custom_call.1} parent=0 // pred_check_branch
    %12 = sbr.rel (0) target = $region9
  $region8: #{tpu_custom_call.1} parent=0 // pred_region
    _
  $region9: #{tpu_custom_call.1} parent=0 // pred_fallthru
    _
  // Predicated region
  $region10: #{tpu_custom_call.1} parent=0 // pred_check
    _
  $region11: #{tpu_custom_call.1} parent=0 // pred_check_branch
    %14 = sbr.rel (0) target = $region13
  $region12: #{tpu_custom_call.1} parent=0 // pred_region
    _
  $region13: #{tpu_custom_call.1} parent=0 // pred_fallthru
    _
  // Predicated region
  $region14: #{tpu_custom_call.1} parent=0 // pred_check
    _
  $region15: #{tpu_custom_call.1} parent=0 // pred_check_branch
    %16 = sbr.rel (0) target = $region17
  $region16: #{tpu_custom_call.1} parent=0 // pred_region
    _
  $region17: #{tpu_custom_call.1} parent=0 // pred_fallthru
    _
  %v17 = vld [vmem:[%s1] sm:$0xff]
  %v18 = vld [vmem:[%s2] sm:$0xff]
  %v19 = vld [vmem:[%s3] sm:$0xff]
  %v20 = vld [vmem:[%s3 + $0x8] sm:$0xff]
  %v21 = vld [vmem:[%s3 + $0x10] sm:$0xff]
  %v22 = vld [vmem:[%s3 + $0x18] sm:$0xff]
  %v23 = vld [vmem:[%s3 + $0x20] sm:$0xff]
  %v24 = vld [vmem:[%s3 + $0x28] sm:$0xff]
  %v25 = vld [vmem:[%s3 + $0x30] sm:$0xff]
  %v26 = vld [vmem:[%s3 + $0x38] sm:$0xff]
  %v27 = vld [vmem:[%s3 + $0x40] sm:$0xff]
  %v28 = vld [vmem:[%s3 + $0x48] sm:$0xff]
  %v29 = vld [vmem:[%s3 + $0x50] sm:$0xff]
  %v30 = vld [vmem:[%s3 + $0x58] sm:$0xff]
  %v31 = vld [vmem:[%s3 + $0x60] sm:$0xff]
  %v32 = vld [vmem:[%s3 + $0x68] sm:$0xff]
  %v33 = vld [vmem:[%s3 + $0x70] sm:$0xff]
  %v34 = vld [vmem:[%s3 + $0x78] sm:$0xff]
  %v35 = vld [vmem:[%s3 + $0x80] sm:$0xff]
  %v36 = vld [vmem:[%s3 + $0x88] sm:$0xff]
  %v37 = vld [vmem:[%s3 + $0x90] sm:$0xff]
  %v38 = vld [vmem:[%s3 + $0x98] sm:$0xff]
  %v39 = vld [vmem:[%s3 + $0xa0] sm:$0xff]
  %v40 = vld [vmem:[%s3 + $0xa8] sm:$0xff]
  %v41 = vld [vmem:[%s3 + $0xb0] sm:$0xff]
  %v42 = vld [vmem:[%s3 + $0xb8] sm:$0xff]
  %v43 = vld [vmem:[%s3 + $0xc0] sm:$0xff]
  %v44 = vld [vmem:[%s3 + $0xc8] sm:$0xff]
  %v45 = vld [vmem:[%s3 + $0xd0] sm:$0xff]
  %v46 = vld [vmem:[%s3 + $0xd8] sm:$0xff]
  %v47 = vld [vmem:[%s3 + $0xe0] sm:$0xff]
  %v48 = vld [vmem:[%s3 + $0xe8] sm:$0xff]
  %v49 = vld [vmem:[%s3 + $0xf0] sm:$0xff]
  %v50 = vld [vmem:[%s3 + $0xf8] sm:$0xff]
  %v51 = vld [vmem:[%s3 + $0x100] sm:$0xff]
  %v52 = vld [vmem:[%s3 + $0x108] sm:$0xff]
  %v53 = vld [vmem:[%s3 + $0x110] sm:$0xff]
  %v54 = vld [vmem:[%s3 + $0x118] sm:$0xff]
  %v55 = vld [vmem:[%s3 + $0x120] sm:$0xff]
  %v56 = vld [vmem:[%s3 + $0x128] sm:$0xff]
  %v57 = vld [vmem:[%s3 + $0x130] sm:$0xff]
  %v58 = vld [vmem:[%s3 + $0x138] sm:$0xff]
  %v59 = vld [vmem:[%s3 + $0x140] sm:$0xff]
  %v60 = vld [vmem:[%s3 + $0x148] sm:$0xff]
  %v61 = vld [vmem:[%s3 + $0x150] sm:$0xff]
  %v62 = vld [vmem:[%s3 + $0x158] sm:$0xff]
  %v63 = vld [vmem:[%s3 + $0x160] sm:$0xff]
  %v64 = vld [vmem:[%s3 + $0x168] sm:$0xff]
  %v65 = vld [vmem:[%s3 + $0x170] sm:$0xff]
  %v66 = vld [vmem:[%s3 + $0x178] sm:$0xff]
  %v67 = vld [vmem:[%s3 + $0x180] sm:$0xff]
  %v68 = vld [vmem:[%s3 + $0x188] sm:$0xff]
  %v69 = vld [vmem:[%s3 + $0x190] sm:$0xff]
  %v70 = vld [vmem:[%s3 + $0x198] sm:$0xff]
  %v71 = vld [vmem:[%s3 + $0x1a0] sm:$0xff]
  %v72 = vld [vmem:[%s3 + $0x1a8] sm:$0xff]
  %v73 = vld [vmem:[%s3 + $0x1b0] sm:$0xff]
  %v74 = vld [vmem:[%s3 + $0x1b8] sm:$0xff]
  %v75 = vld [vmem:[%s3 + $0x1c0] sm:$0xff]
  %v76 = vld [vmem:[%s3 + $0x1c8] sm:$0xff]
  %v77 = vld [vmem:[%s3 + $0x1d0] sm:$0xff]
  %v78 = vld [vmem:[%s3 + $0x1d8] sm:$0xff]
  %v79 = vld [vmem:[%s3 + $0x1e0] sm:$0xff]
  %v80 = vld [vmem:[%s3 + $0x1e8] sm:$0xff]
  %v81 = vld [vmem:[%s3 + $0x1f0] sm:$0xff]
  %v82 = vld [vmem:[%s3 + $0x1f8] sm:$0xff]
  %v83 = vld [vmem:[%s3 + $0x200] sm:$0xff]
  %v84 = vld [vmem:[%s3 + $0x208] sm:$0xff]
  %v85 = vld [vmem:[%s3 + $0x210] sm:$0xff]
  %v86 = vld [vmem:[%s3 + $0x218] sm:$0xff]
  %v87 = vld [vmem:[%s3 + $0x220] sm:$0xff]
  %v88 = vld [vmem:[%s3 + $0x228] sm:$0xff]
  %v89 = vld [vmem:[%s3 + $0x230] sm:$0xff]
  %v90 = vld [vmem:[%s3 + $0x238] sm:$0xff]
  %v91 = vld [vmem:[%s3 + $0x240] sm:$0xff]
  %v92 = vld [vmem:[%s3 + $0x248] sm:$0xff]
  %v93 = vld [vmem:[%s3 + $0x250] sm:$0xff]
  %v94 = vld [vmem:[%s3 + $0x258] sm:$0xff]
  %v95 = vld [vmem:[%s3 + $0x260] sm:$0xff]
  %v96 = vld [vmem:[%s3 + $0x268] sm:$0xff]
  %v97 = vld [vmem:[%s3 + $0x270] sm:$0xff]
  %v98 = vld [vmem:[%s3 + $0x278] sm:$0xff]
  %v99 = vld [vmem:[%s3 + $0x280] sm:$0xff]
  %v100 = vld [vmem:[%s3 + $0x288] sm:$0xff]
  %v101 = vld [vmem:[%s3 + $0x290] sm:$0xff]
  %v102 = vld [vmem:[%s3 + $0x298] sm:$0xff]
  %v103 = vld [vmem:[%s3 + $0x2a0] sm:$0xff]
  %v104 = vld [vmem:[%s3 + $0x2a8] sm:$0xff]
  %v105 = vld [vmem:[%s3 + $0x2b0] sm:$0xff]
  %v106 = vld [vmem:[%s3 + $0x2b8] sm:$0xff]
  %v107 = vld [vmem:[%s3 + $0x2c0] sm:$0xff]
  %v108 = vld [vmem:[%s3 + $0x2c8] sm:$0xff]
  %v109 = vld [vmem:[%s3 + $0x2d0] sm:$0xff]
  %v110 = vld [vmem:[%s3 + $0x2d8] sm:$0xff]
  %v111 = vld [vmem:[%s3 + $0x2e0] sm:$0xff]
  %v112 = vld [vmem:[%s3 + $0x2e8] sm:$0xff]
  %v113 = vld [vmem:[%s3 + $0x2f0] sm:$0xff]
  %v114 = vld [vmem:[%s3 + $0x2f8] sm:$0xff]
  %v115 = vld [vmem:[%s3 + $0x300] sm:$0xff]
  %v116 = vld [vmem:[%s3 + $0x308] sm:$0xff]
  %v117 = vld [vmem:[%s3 + $0x310] sm:$0xff]
  %v118 = vld [vmem:[%s3 + $0x318] sm:$0xff]
  %v119 = vld [vmem:[%s3 + $0x320] sm:$0xff]
  %v120 = vld [vmem:[%s3 + $0x328] sm:$0xff]
  %v121 = vld [vmem:[%s3 + $0x330] sm:$0xff]
  %v122 = vld [vmem:[%s3 + $0x338] sm:$0xff]
  %v123 = vld [vmem:[%s3 + $0x340] sm:$0xff]
  %v124 = vld [vmem:[%s3 + $0x348] sm:$0xff]
  %v125 = vld [vmem:[%s3 + $0x350] sm:$0xff]
  %v126 = vld [vmem:[%s3 + $0x358] sm:$0xff]
  %v127 = vld [vmem:[%s3 + $0x360] sm:$0xff]
  %v128 = vld [vmem:[%s3 + $0x368] sm:$0xff]
  %v129 = vld [vmem:[%s3 + $0x370] sm:$0xff]
  %v130 = vld [vmem:[%s3 + $0x378] sm:$0xff]
  %v131 = vld [vmem:[%s3 + $0x380] sm:$0xff]
  %v132 = vld [vmem:[%s3 + $0x388] sm:$0xff]
  %v133 = vld [vmem:[%s3 + $0x390] sm:$0xff]
  %v134 = vld [vmem:[%s3 + $0x398] sm:$0xff]
  %v135 = vld [vmem:[%s3 + $0x3a0] sm:$0xff]
  %v136 = vld [vmem:[%s3 + $0x3a8] sm:$0xff]
  %v137 = vld [vmem:[%s3 + $0x3b0] sm:$0xff]
  %v138 = vld [vmem:[%s3 + $0x3b8] sm:$0xff]
  %v139 = vld [vmem:[%s3 + $0x3c0] sm:$0xff]
  %v140 = vld [vmem:[%s3 + $0x3c8] sm:$0xff]
  %v141 = vld [vmem:[%s3 + $0x3d0] sm:$0xff]
  %v142 = vld [vmem:[%s3 + $0x3d8] sm:$0xff]
  %v143 = vld [vmem:[%s3 + $0x3e0] sm:$0xff]
  %v144 = vld [vmem:[%s3 + $0x3e8] sm:$0xff]
  %v145 = vld [vmem:[%s3 + $0x3f0] sm:$0xff]
  %v146 = vld [vmem:[%s3 + $0x3f8] sm:$0xff]
  %vm147 = vcmp.gt.f32.partialorder %v18, 0.0
  %v148 = vsel %vm147, 1.0, 0.0
  %vm149 = vcmp.gt.f32.partialorder %v17, -1e+08
  %v150 = vand.u32 2147483647, %v18
  %v151 = vsel %vm149, %v150, -1.0
  %152 = vmax.xlane.f32.xlu0 %v17
  %v153 = vpop.xlane.xlu0 %152
  %v154 = vsub.f32 %v17, %v153
  %v155 = vmul.f32 %v154, 1.442695
  %v156 = vpow.pop %v155
  %v157 = vld [vmem:[%s0] sm:$0xff]
  %v158 = vld [vmem:[%s0 + $0x8] sm:$0xff]
  %v159 = vld [vmem:[%s0 + $0x10] sm:$0xff]
  %v160 = vld [vmem:[%s0 + $0x18] sm:$0xff]
  %v161 = vld [vmem:[%s0 + $0x20] sm:$0xff]
  %v162 = vld [vmem:[%s0 + $0x28] sm:$0xff]
  %v163 = vld [vmem:[%s0 + $0x30] sm:$0xff]
  %v164 = vld [vmem:[%s0 + $0x38] sm:$0xff]
  %v165 = vld [vmem:[%s0 + $0x40] sm:$0xff]
  %v166 = vld [vmem:[%s0 + $0x48] sm:$0xff]
  %v167 = vld [vmem:[%s0 + $0x50] sm:$0xff]
  %v168 = vld [vmem:[%s0 + $0x58] sm:$0xff]
  %v169 = vld [vmem:[%s0 + $0x60] sm:$0xff]
  %v170 = vld [vmem:[%s0 + $0x68] sm:$0xff]
  %v171 = vld [vmem:[%s0 + $0x70] sm:$0xff]
  %v172 = vld [vmem:[%s0 + $0x78] sm:$0xff]
  %v173 = vpack.c.bf16 %v156, %v156
  %v174 = vunpack.c.l.bf16 %v173
  %v175 = vsub.f32 %v156, %v174
  %176 = vmatprep.subr.mxu0 0.0
  %177 = vmatpush1.msra.mxu0 %v157
  %178 = vmatprep.subr.mxu0 0.0
  %179 = vmatpush1.msra.mxu0 %v158
  %180 = vmatprep.subr.mxu0 0.0
  %181 = vmatpush1.msra.mxu0 %v159
  %182 = vmatprep.subr.mxu0 0.0
  %183 = vmatpush1.msra.mxu0 %v160
  %184 = vmatprep.subr.mxu0 0.0
  %185 = vmatpush1.msra.mxu0 %v161
  %186 = vmatprep.subr.mxu0 0.0
  %187 = vmatpush1.msra.mxu0 %v162
  %188 = vmatprep.subr.mxu0 0.0
  %189 = vmatpush1.msra.mxu0 %v163
  %190 = vmatprep.subr.mxu0 0.0
  %191 = vmatpush1.msra.mxu0 %v164
  %192 = vmatprep.subr.mxu0 0.0
  %193 = vmatpush1.msra.mxu0 %v165
  %194 = vmatprep.subr.mxu0 0.0
  %195 = vmatpush1.msra.mxu0 %v166
  %196 = vmatprep.subr.mxu0 0.0
  %197 = vmatpush1.msra.mxu0 %v167
  %198 = vmatprep.subr.mxu0 0.0
  %199 = vmatpush1.msra.mxu0 %v168
  %200 = vmatprep.subr.mxu0 0.0
  %201 = vmatpush1.msra.mxu0 %v169
  %202 = vmatprep.subr.mxu0 0.0
  %203 = vmatpush1.msra.mxu0 %v170
  %204 = vmatprep.subr.mxu0 0.0
  %205 = vmatpush1.msra.mxu0 %v171
  %206 = vmatprep.subr.mxu0 0.0
  %207 = vmatpush1.msra.mxu0 %v172
  %208 = vmatprep.subr.mxu0 0.0
  %209 = vmatpush1.msra.mxu0 0.0
  %210 = vmatprep.subr.mxu0 0.0
  %211 = vmatpush1.msra.mxu0 0.0
  %212 = vmatprep.subr.mxu0 0.0
  %213 = vmatpush1.msra.mxu0 0.0
  %214 = vmatprep.subr.mxu0 0.0
  %215 = vmatpush1.msra.mxu0 0.0
  %216 = vmatprep.subr.mxu0 0.0
  %217 = vmatpush1.msra.mxu0 0.0
  %218 = vmatprep.subr.mxu0 0.0
  %219 = vmatpush1.msra.mxu0 0.0
  %220 = vmatprep.subr.mxu0 0.0
  %221 = vmatpush1.msra.mxu0 0.0
  %222 = vmatprep.subr.mxu0 0.0
  %223 = vmatpush1.msra.mxu0 0.0
  %224 = vmatprep.subr.mxu0 0.0
  %225 = vmatpush1.msra.mxu0 0.0
  %226 = vmatprep.subr.mxu0 0.0
  %227 = vmatpush1.msra.mxu0 0.0
  %228 = vmatprep.subr.mxu0 0.0
  %229 = vmatpush1.msra.mxu0 0.0
  %230 = vmatprep.subr.mxu0 0.0
  %231 = vmatpush1.msra.mxu0 0.0
  %232 = vmatprep.subr.mxu0 0.0
  %233 = vmatpush1.msra.mxu0 0.0
  %234 = vmatprep.subr.mxu0 0.0
  %235 = vmatpush1.msra.mxu0 0.0
  %236 = vmatprep.subr.mxu0 0.0
  %237 = vmatpush1.msra.mxu0 0.0
  %238 = vmatprep.subr.mxu0 0.0
  %239 = vmatpush1.msra.mxu0 0.0
  %240 = vmatprep.mubr.f32.mxu0 0.0
  %241 = vmatmul.mubr.f32.gmra.mrb[0].mxu0 %v175
  %v242 = vpop.f32.mrb[0].mxu0
  %v243 = vadd.f32 0.0, %v242
  %v244 = vpop.f32.mrb[0].mxu0
  %245 = vdwg.mxu0
  %246 = vmatprep.subr.mxu0 0.0
  %247 = vmatpush1.msra.mxu0 %v157
  %248 = vmatprep.subr.mxu0 0.0
  %249 = vmatpush1.msra.mxu0 %v158
  %250 = vmatprep.subr.mxu0 0.0
  %251 = vmatpush1.msra.mxu0 %v159
  %252 = vmatprep.subr.mxu0 0.0
  %253 = vmatpush1.msra.mxu0 %v160
  %254 = vmatprep.subr.mxu0 0.0
  %255 = vmatpush1.msra.mxu0 %v161
  %256 = vmatprep.subr.mxu0 0.0
  %257 = vmatpush1.msra.mxu0 %v162
  %258 = vmatprep.subr.mxu0 0.0
  %259 = vmatpush1.msra.mxu0 %v163
  %260 = vmatprep.subr.mxu0 0.0
  %261 = vmatpush1.msra.mxu0 %v164
  %262 = vmatprep.subr.mxu0 0.0
  %263 = vmatpush1.msra.mxu0 %v165
  %264 = vmatprep.subr.mxu0 0.0
  %265 = vmatpush1.msra.mxu0 %v166
  %266 = vmatprep.subr.mxu0 0.0
  %267 = vmatpush1.msra.mxu0 %v167
  %268 = vmatprep.subr.mxu0 0.0
  %269 = vmatpush1.msra.mxu0 %v168
  %270 = vmatprep.subr.mxu0 0.0
  %271 = vmatpush1.msra.mxu0 %v169
  %272 = vmatprep.subr.mxu0 0.0
  %273 = vmatpush1.msra.mxu0 %v170
  %274 = vmatprep.subr.mxu0 0.0
  %275 = vmatpush1.msra.mxu0 %v171
  %276 = vmatprep.subr.mxu0 0.0
  %277 = vmatpush1.msra.mxu0 %v172
  %278 = vmatprep.subr.mxu0 0.0
  %279 = vmatpush1.msra.mxu0 0.0
  %280 = vmatprep.subr.mxu0 0.0
  %281 = vmatpush1.msra.mxu0 0.0
  %282 = vmatprep.subr.mxu0 0.0
  %283 = vmatpush1.msra.mxu0 0.0
  %284 = vmatprep.subr.mxu0 0.0
  %285 = vmatpush1.msra.mxu0 0.0
  %286 = vmatprep.subr.mxu0 0.0
  %287 = vmatpush1.msra.mxu0 0.0
  %288 = vmatprep.subr.mxu0 0.0
  %289 = vmatpush1.msra.mxu0 0.0
  %290 = vmatprep.subr.mxu0 0.0
  %291 = vmatpush1.msra.mxu0 0.0
  %292 = vmatprep.subr.mxu0 0.0
  %293 = vmatpush1.msra.mxu0 0.0
  %294 = vmatprep.subr.mxu0 0.0
  %295 = vmatpush1.msra.mxu0 0.0
  %296 = vmatprep.subr.mxu0 0.0
  %297 = vmatpush1.msra.mxu0 0.0
  %298 = vmatprep.subr.mxu0 0.0
  %299 = vmatpush1.msra.mxu0 0.0
  %300 = vmatprep.subr.mxu0 0.0
  %301 = vmatpush1.msra.mxu0 0.0
  %302 = vmatprep.subr.mxu0 0.0
  %303 = vmatpush1.msra.mxu0 0.0
  %304 = vmatprep.subr.mxu0 0.0
  %305 = vmatpush1.msra.mxu0 0.0
  %306 = vmatprep.subr.mxu0 0.0
  %307 = vmatpush1.msra.mxu0 0.0
  %308 = vmatprep.subr.mxu0 0.0
  %309 = vmatpush1.msra.mxu0 0.0
  %310 = vmatprep.mubr.f32.mxu0 0.0
  %311 = vmatmul.mubr.f32.gmra.mrb[0].mxu0 %v174
  %v312 = vpop.f32.mrb[0].mxu0
  %v313 = vadd.f32 %v243, %v312
  %v314 = vpop.f32.mrb[0].mxu0
  %315 = vdwg.mxu0
  %v316 = vlog2.pop %v313
  %v317 = vmul.f32 %v316, 0.6931472
  %v318 = vadd.f32 %v317, %v153
  %v320 = vcombine.high %v151, %v151
  %v322 = vunpack.c.l.s4 1966171168
  %v323 = vunpack.c.0.s8 %v322
  %v324 = vlaneseq
  %v325 = vshrl.u32 %v324, 7
  %v326 = vsub.s32 %v323, %v325
  %v327 = vrot.slane %v151, %v326
  %v329 = vunpack.c.l.s4 1966171168
  %v330 = vunpack.c.0.s8 %v329
  %v331 = vlaneseq
  %v332 = vshrl.u32 %v331, 7
  %v333 = vsub.s32 %v330, %v332
  %v334 = vrot.slane %v320, %v333
  %v335 = vcombine.high %v327, %v327
  %v336 = vcombine.high %v334, %v334
  %v338 = vunpack.c.l.s4 1966171168
  %v339 = vunpack.c.0.s8 %v338
  %v340 = vlaneseq
  %v341 = vshrl.u32 %v340, 7
  %v342 = vsub.s32 %v339, %v341
  %v343 = vrot.slane %v327, %v342
  %v345 = vunpack.c.l.s4 1966171168
  %v346 = vunpack.c.0.s8 %v345
  %v347 = vlaneseq
  %v348 = vshrl.u32 %v347, 7
  %v349 = vsub.s32 %v346, %v348
  %v350 = vrot.slane %v334, %v349
  %v352 = vunpack.c.l.s4 1966171168
  %v353 = vunpack.c.0.s8 %v352
  %v354 = vlaneseq
  %v355 = vshrl.u32 %v354, 7
  %v356 = vsub.s32 %v353, %v355
  %v357 = vrot.slane %v335, %v356
  %v359 = vunpack.c.l.s4 1966171168
  %v360 = vunpack.c.0.s8 %v359
  %v361 = vlaneseq
  %v362 = vshrl.u32 %v361, 7
  %v363 = vsub.s32 %v360, %v362
  %v364 = vrot.slane %v336, %v363
  %v365 = vcombine.high %v343, %v343
  %v366 = vcombine.high %v350, %v350
  %v367 = vcombine.high %v357, %v357
  %v368 = vcombine.high %v364, %v364
  %370 = vset.pattern.permute.xlu0 0
  %371 = vperm.xlu0 %370, %v19
  %v372 = vpop.permute.xlu0 %371
  %375 = vset.pattern.permute.xlu0 0
  %376 = vperm.xlu0 %375, %v20
  %v377 = vpop.permute.xlu0 %376
  %380 = vset.pattern.permute.xlu0 0
  %381 = vperm.xlu0 %380, %v21
  %v382 = vpop.permute.xlu0 %381
  %385 = vset.pattern.permute.xlu0 0
  %386 = vperm.xlu0 %385, %v22
  %v387 = vpop.permute.xlu0 %386
  %390 = vset.pattern.permute.xlu0 0
  %391 = vperm.xlu0 %390, %v23
  %v392 = vpop.permute.xlu0 %391
  %395 = vset.pattern.permute.xlu0 0
  %396 = vperm.xlu0 %395, %v24
  %v397 = vpop.permute.xlu0 %396
  %400 = vset.pattern.permute.xlu0 0
  %401 = vperm.xlu0 %400, %v25
  %v402 = vpop.permute.xlu0 %401
  %405 = vset.pattern.permute.xlu0 0
  %406 = vperm.xlu0 %405, %v26
  %v407 = vpop.permute.xlu0 %406
  %410 = vset.pattern.permute.xlu0 0
  %411 = vperm.xlu0 %410, %v27
  %v412 = vpop.permute.xlu0 %411
  %415 = vset.pattern.permute.xlu0 0
  %416 = vperm.xlu0 %415, %v28
  %v417 = vpop.permute.xlu0 %416
  %420 = vset.pattern.permute.xlu0 0
  %421 = vperm.xlu0 %420, %v29
  %v422 = vpop.permute.xlu0 %421
  %425 = vset.pattern.permute.xlu0 0
  %426 = vperm.xlu0 %425, %v30
  %v427 = vpop.permute.xlu0 %426
  %430 = vset.pattern.permute.xlu0 0
  %431 = vperm.xlu0 %430, %v31
  %v432 = vpop.permute.xlu0 %431
  %435 = vset.pattern.permute.xlu0 0
  %436 = vperm.xlu0 %435, %v32
  %v437 = vpop.permute.xlu0 %436
  %440 = vset.pattern.permute.xlu0 0
  %441 = vperm.xlu0 %440, %v33
  %v442 = vpop.permute.xlu0 %441
  %445 = vset.pattern.permute.xlu0 0
  %446 = vperm.xlu0 %445, %v34
  %v447 = vpop.permute.xlu0 %446
  %450 = vset.pattern.permute.xlu0 0
  %451 = vperm.xlu0 %450, %v35
  %v452 = vpop.permute.xlu0 %451
  %455 = vset.pattern.permute.xlu0 0
  %456 = vperm.xlu0 %455, %v36
  %v457 = vpop.permute.xlu0 %456
  %460 = vset.pattern.permute.xlu0 0
  %461 = vperm.xlu0 %460, %v37
  %v462 = vpop.permute.xlu0 %461
  %465 = vset.pattern.permute.xlu0 0
  %466 = vperm.xlu0 %465, %v38
  %v467 = vpop.permute.xlu0 %466
  %470 = vset.pattern.permute.xlu0 0
  %471 = vperm.xlu0 %470, %v39
  %v472 = vpop.permute.xlu0 %471
  %475 = vset.pattern.permute.xlu0 0
  %476 = vperm.xlu0 %475, %v40
  %v477 = vpop.permute.xlu0 %476
  %480 = vset.pattern.permute.xlu0 0
  %481 = vperm.xlu0 %480, %v41
  %v482 = vpop.permute.xlu0 %481
  %485 = vset.pattern.permute.xlu0 0
  %486 = vperm.xlu0 %485, %v42
  %v487 = vpop.permute.xlu0 %486
  %490 = vset.pattern.permute.xlu0 0
  %491 = vperm.xlu0 %490, %v43
  %v492 = vpop.permute.xlu0 %491
  %495 = vset.pattern.permute.xlu0 0
  %496 = vperm.xlu0 %495, %v44
  %v497 = vpop.permute.xlu0 %496
  %500 = vset.pattern.permute.xlu0 0
  %501 = vperm.xlu0 %500, %v45
  %v502 = vpop.permute.xlu0 %501
  %505 = vset.pattern.permute.xlu0 0
  %506 = vperm.xlu0 %505, %v46
  %v507 = vpop.permute.xlu0 %506
  %510 = vset.pattern.permute.xlu0 0
  %511 = vperm.xlu0 %510, %v47
  %v512 = vpop.permute.xlu0 %511
  %515 = vset.pattern.permute.xlu0 0
  %516 = vperm.xlu0 %515, %v48
  %v517 = vpop.permute.xlu0 %516
  %520 = vset.pattern.permute.xlu0 0
  %521 = vperm.xlu0 %520, %v49
  %v522 = vpop.permute.xlu0 %521
  %525 = vset.pattern.permute.xlu0 0
  %526 = vperm.xlu0 %525, %v50
  %v527 = vpop.permute.xlu0 %526
  %530 = vset.pattern.permute.xlu0 0
  %531 = vperm.xlu0 %530, %v51
  %v532 = vpop.permute.xlu0 %531
  %535 = vset.pattern.permute.xlu0 0
  %536 = vperm.xlu0 %535, %v52
  %v537 = vpop.permute.xlu0 %536
  %540 = vset.pattern.permute.xlu0 0
  %541 = vperm.xlu0 %540, %v53
  %v542 = vpop.permute.xlu0 %541
  %545 = vset.pattern.permute.xlu0 0
  %546 = vperm.xlu0 %545, %v54
  %v547 = vpop.permute.xlu0 %546
  %550 = vset.pattern.permute.xlu0 0
  %551 = vperm.xlu0 %550, %v55
  %v552 = vpop.permute.xlu0 %551
  %555 = vset.pattern.permute.xlu0 0
  %556 = vperm.xlu0 %555, %v56
  %v557 = vpop.permute.xlu0 %556
  %560 = vset.pattern.permute.xlu0 0
  %561 = vperm.xlu0 %560, %v57
  %v562 = vpop.permute.xlu0 %561
  %565 = vset.pattern.permute.xlu0 0
  %566 = vperm.xlu0 %565, %v58
  %v567 = vpop.permute.xlu0 %566
  %570 = vset.pattern.permute.xlu0 0
  %571 = vperm.xlu0 %570, %v59
  %v572 = vpop.permute.xlu0 %571
  %575 = vset.pattern.permute.xlu0 0
  %576 = vperm.xlu0 %575, %v60
  %v577 = vpop.permute.xlu0 %576
  %580 = vset.pattern.permute.xlu0 0
  %581 = vperm.xlu0 %580, %v61
  %v582 = vpop.permute.xlu0 %581
  %585 = vset.pattern.permute.xlu0 0
  %586 = vperm.xlu0 %585, %v62
  %v587 = vpop.permute.xlu0 %586
  %590 = vset.pattern.permute.xlu0 0
  %591 = vperm.xlu0 %590, %v63
  %v592 = vpop.permute.xlu0 %591
  %595 = vset.pattern.permute.xlu0 0
  %596 = vperm.xlu0 %595, %v64
  %v597 = vpop.permute.xlu0 %596
  %600 = vset.pattern.permute.xlu0 0
  %601 = vperm.xlu0 %600, %v65
  %v602 = vpop.permute.xlu0 %601
  %605 = vset.pattern.permute.xlu0 0
  %606 = vperm.xlu0 %605, %v66
  %v607 = vpop.permute.xlu0 %606
  %610 = vset.pattern.permute.xlu0 0
  %611 = vperm.xlu0 %610, %v67
  %v612 = vpop.permute.xlu0 %611
  %615 = vset.pattern.permute.xlu0 0
  %616 = vperm.xlu0 %615, %v68
  %v617 = vpop.permute.xlu0 %616
  %620 = vset.pattern.permute.xlu0 0
  %621 = vperm.xlu0 %620, %v69
  %v622 = vpop.permute.xlu0 %621
  %625 = vset.pattern.permute.xlu0 0
  %626 = vperm.xlu0 %625, %v70
  %v627 = vpop.permute.xlu0 %626
  %630 = vset.pattern.permute.xlu0 0
  %631 = vperm.xlu0 %630, %v71
  %v632 = vpop.permute.xlu0 %631
  %635 = vset.pattern.permute.xlu0 0
  %636 = vperm.xlu0 %635, %v72
  %v637 = vpop.permute.xlu0 %636
  %640 = vset.pattern.permute.xlu0 0
  %641 = vperm.xlu0 %640, %v73
  %v642 = vpop.permute.xlu0 %641
  %645 = vset.pattern.permute.xlu0 0
  %646 = vperm.xlu0 %645, %v74
  %v647 = vpop.permute.xlu0 %646
  %650 = vset.pattern.permute.xlu0 0
  %651 = vperm.xlu0 %650, %v75
  %v652 = vpop.permute.xlu0 %651
  %655 = vset.pattern.permute.xlu0 0
  %656 = vperm.xlu0 %655, %v76
  %v657 = vpop.permute.xlu0 %656
  %660 = vset.pattern.permute.xlu0 0
  %661 = vperm.xlu0 %660, %v77
  %v662 = vpop.permute.xlu0 %661
  %665 = vset.pattern.permute.xlu0 0
  %666 = vperm.xlu0 %665, %v78
  %v667 = vpop.permute.xlu0 %666
  %670 = vset.pattern.permute.xlu0 0
  %671 = vperm.xlu0 %670, %v79
  %v672 = vpop.permute.xlu0 %671
  %675 = vset.pattern.permute.xlu0 0
  %676 = vperm.xlu0 %675, %v80
  %v677 = vpop.permute.xlu0 %676
  %680 = vset.pattern.permute.xlu0 0
  %681 = vperm.xlu0 %680, %v81
  %v682 = vpop.permute.xlu0 %681
  %685 = vset.pattern.permute.xlu0 0
  %686 = vperm.xlu0 %685, %v82
  %v687 = vpop.permute.xlu0 %686
  %690 = vset.pattern.permute.xlu0 0
  %691 = vperm.xlu0 %690, %v83
  %v692 = vpop.permute.xlu0 %691
  %695 = vset.pattern.permute.xlu0 0
  %696 = vperm.xlu0 %695, %v84
  %v697 = vpop.permute.xlu0 %696
  %700 = vset.pattern.permute.xlu0 0
  %701 = vperm.xlu0 %700, %v85
  %v702 = vpop.permute.xlu0 %701
  %705 = vset.pattern.permute.xlu0 0
  %706 = vperm.xlu0 %705, %v86
  %v707 = vpop.permute.xlu0 %706
  %710 = vset.pattern.permute.xlu0 0
  %711 = vperm.xlu0 %710, %v87
  %v712 = vpop.permute.xlu0 %711
  %715 = vset.pattern.permute.xlu0 0
  %716 = vperm.xlu0 %715, %v88
  %v717 = vpop.permute.xlu0 %716
  %720 = vset.pattern.permute.xlu0 0
  %721 = vperm.xlu0 %720, %v89
  %v722 = vpop.permute.xlu0 %721
  %725 = vset.pattern.permute.xlu0 0
  %726 = vperm.xlu0 %725, %v90
  %v727 = vpop.permute.xlu0 %726
  %730 = vset.pattern.permute.xlu0 0
  %731 = vperm.xlu0 %730, %v91
  %v732 = vpop.permute.xlu0 %731
  %735 = vset.pattern.permute.xlu0 0
  %736 = vperm.xlu0 %735, %v92
  %v737 = vpop.permute.xlu0 %736
  %740 = vset.pattern.permute.xlu0 0
  %741 = vperm.xlu0 %740, %v93
  %v742 = vpop.permute.xlu0 %741
  %745 = vset.pattern.permute.xlu0 0
  %746 = vperm.xlu0 %745, %v94
  %v747 = vpop.permute.xlu0 %746
  %750 = vset.pattern.permute.xlu0 0
  %751 = vperm.xlu0 %750, %v95
  %v752 = vpop.permute.xlu0 %751
  %755 = vset.pattern.permute.xlu0 0
  %756 = vperm.xlu0 %755, %v96
  %v757 = vpop.permute.xlu0 %756
  %760 = vset.pattern.permute.xlu0 0
  %761 = vperm.xlu0 %760, %v97
  %v762 = vpop.permute.xlu0 %761
  %765 = vset.pattern.permute.xlu0 0
  %766 = vperm.xlu0 %765, %v98
  %v767 = vpop.permute.xlu0 %766
  %770 = vset.pattern.permute.xlu0 0
  %771 = vperm.xlu0 %770, %v99
  %v772 = vpop.permute.xlu0 %771
  %775 = vset.pattern.permute.xlu0 0
  %776 = vperm.xlu0 %775, %v100
  %v777 = vpop.permute.xlu0 %776
  %780 = vset.pattern.permute.xlu0 0
  %781 = vperm.xlu0 %780, %v101
  %v782 = vpop.permute.xlu0 %781
  %785 = vset.pattern.permute.xlu0 0
  %786 = vperm.xlu0 %785, %v102
  %v787 = vpop.permute.xlu0 %786
  %790 = vset.pattern.permute.xlu0 0
  %791 = vperm.xlu0 %790, %v103
  %v792 = vpop.permute.xlu0 %791
  %795 = vset.pattern.permute.xlu0 0
  %796 = vperm.xlu0 %795, %v104
  %v797 = vpop.permute.xlu0 %796
  %800 = vset.pattern.permute.xlu0 0
  %801 = vperm.xlu0 %800, %v105
  %v802 = vpop.permute.xlu0 %801
  %805 = vset.pattern.permute.xlu0 0
  %806 = vperm.xlu0 %805, %v106
  %v807 = vpop.permute.xlu0 %806
  %810 = vset.pattern.permute.xlu0 0
  %811 = vperm.xlu0 %810, %v107
  %v812 = vpop.permute.xlu0 %811
  %815 = vset.pattern.permute.xlu0 0
  %816 = vperm.xlu0 %815, %v108
  %v817 = vpop.permute.xlu0 %816
  %820 = vset.pattern.permute.xlu0 0
  %821 = vperm.xlu0 %820, %v109
  %v822 = vpop.permute.xlu0 %821
  %825 = vset.pattern.permute.xlu0 0
  %826 = vperm.xlu0 %825, %v110
  %v827 = vpop.permute.xlu0 %826
  %830 = vset.pattern.permute.xlu0 0
  %831 = vperm.xlu0 %830, %v111
  %v832 = vpop.permute.xlu0 %831
  %835 = vset.pattern.permute.xlu0 0
  %836 = vperm.xlu0 %835, %v112
  %v837 = vpop.permute.xlu0 %836
  %840 = vset.pattern.permute.xlu0 0
  %841 = vperm.xlu0 %840, %v113
  %v842 = vpop.permute.xlu0 %841
  %845 = vset.pattern.permute.xlu0 0
  %846 = vperm.xlu0 %845, %v114
  %v847 = vpop.permute.xlu0 %846
  %850 = vset.pattern.permute.xlu0 0
  %851 = vperm.xlu0 %850, %v115
  %v852 = vpop.permute.xlu0 %851
  %855 = vset.pattern.permute.xlu0 0
  %856 = vperm.xlu0 %855, %v116
  %v857 = vpop.permute.xlu0 %856
  %860 = vset.pattern.permute.xlu0 0
  %861 = vperm.xlu0 %860, %v117
  %v862 = vpop.permute.xlu0 %861
  %865 = vset.pattern.permute.xlu0 0
  %866 = vperm.xlu0 %865, %v118
  %v867 = vpop.permute.xlu0 %866
  %870 = vset.pattern.permute.xlu0 0
  %871 = vperm.xlu0 %870, %v119
  %v872 = vpop.permute.xlu0 %871
  %875 = vset.pattern.permute.xlu0 0
  %876 = vperm.xlu0 %875, %v120
  %v877 = vpop.permute.xlu0 %876
  %880 = vset.pattern.permute.xlu0 0
  %881 = vperm.xlu0 %880, %v121
  %v882 = vpop.permute.xlu0 %881
  %885 = vset.pattern.permute.xlu0 0
  %886 = vperm.xlu0 %885, %v122
  %v887 = vpop.permute.xlu0 %886
  %890 = vset.pattern.permute.xlu0 0
  %891 = vperm.xlu0 %890, %v123
  %v892 = vpop.permute.xlu0 %891
  %895 = vset.pattern.permute.xlu0 0
  %896 = vperm.xlu0 %895, %v124
  %v897 = vpop.permute.xlu0 %896
  %900 = vset.pattern.permute.xlu0 0
  %901 = vperm.xlu0 %900, %v125
  %v902 = vpop.permute.xlu0 %901
  %905 = vset.pattern.permute.xlu0 0
  %906 = vperm.xlu0 %905, %v126
  %v907 = vpop.permute.xlu0 %906
  %910 = vset.pattern.permute.xlu0 0
  %911 = vperm.xlu0 %910, %v127
  %v912 = vpop.permute.xlu0 %911
  %915 = vset.pattern.permute.xlu0 0
  %916 = vperm.xlu0 %915, %v128
  %v917 = vpop.permute.xlu0 %916
  %920 = vset.pattern.permute.xlu0 0
  %921 = vperm.xlu0 %920, %v129
  %v922 = vpop.permute.xlu0 %921
  %925 = vset.pattern.permute.xlu0 0
  %926 = vperm.xlu0 %925, %v130
  %v927 = vpop.permute.xlu0 %926
  %930 = vset.pattern.permute.xlu0 0
  %931 = vperm.xlu0 %930, %v131
  %v932 = vpop.permute.xlu0 %931
  %935 = vset.pattern.permute.xlu0 0
  %936 = vperm.xlu0 %935, %v132
  %v937 = vpop.permute.xlu0 %936
  %940 = vset.pattern.permute.xlu0 0
  %941 = vperm.xlu0 %940, %v133
  %v942 = vpop.permute.xlu0 %941
  %945 = vset.pattern.permute.xlu0 0
  %946 = vperm.xlu0 %945, %v134
  %v947 = vpop.permute.xlu0 %946
  %950 = vset.pattern.permute.xlu0 0
  %951 = vperm.xlu0 %950, %v135
  %v952 = vpop.permute.xlu0 %951
  %955 = vset.pattern.permute.xlu0 0
  %956 = vperm.xlu0 %955, %v136
  %v957 = vpop.permute.xlu0 %956
  %960 = vset.pattern.permute.xlu0 0
  %961 = vperm.xlu0 %960, %v137
  %v962 = vpop.permute.xlu0 %961
  %965 = vset.pattern.permute.xlu0 0
  %966 = vperm.xlu0 %965, %v138
  %v967 = vpop.permute.xlu0 %966
  %970 = vset.pattern.permute.xlu0 0
  %971 = vperm.xlu0 %970, %v139
  %v972 = vpop.permute.xlu0 %971
  %975 = vset.pattern.permute.xlu0 0
  %976 = vperm.xlu0 %975, %v140
  %v977 = vpop.permute.xlu0 %976
  %980 = vset.pattern.permute.xlu0 0
  %981 = vperm.xlu0 %980, %v141
  %v982 = vpop.permute.xlu0 %981
  %985 = vset.pattern.permute.xlu0 0
  %986 = vperm.xlu0 %985, %v142
  %v987 = vpop.permute.xlu0 %986
  %990 = vset.pattern.permute.xlu0 0
  %991 = vperm.xlu0 %990, %v143
  %v992 = vpop.permute.xlu0 %991
  %995 = vset.pattern.permute.xlu0 0
  %996 = vperm.xlu0 %995, %v144
  %v997 = vpop.permute.xlu0 %996
  %1000 = vset.pattern.permute.xlu0 0
  %1001 = vperm.xlu0 %1000, %v145
  %v1002 = vpop.permute.xlu0 %1001
  %1005 = vset.pattern.permute.xlu0 0
  %1006 = vperm.xlu0 %1005, %v146
  %v1007 = vpop.permute.xlu0 %1006
  %v1009 = vlaneseq
  %v1010 = vshrl.u32 %v1009, 7
  %v1011 = vsub.s32 0, %v1010
  %v1012 = vrot.slane %v343, %v1011
  %v1013 = vlaneseq
  %v1014 = vshrl.u32 %v1013, 7
  %v1015 = vsub.s32 0, %v1014
  %v1016 = vrot.slane %v357, %v1015
  %v1017 = vlaneseq
  %v1018 = vshrl.u32 %v1017, 7
  %v1019 = vsub.s32 0, %v1018
  %v1020 = vrot.slane %v365, %v1019
  %v1021 = vlaneseq
  %v1022 = vshrl.u32 %v1021, 7
  %v1023 = vsub.s32 0, %v1022
  %v1024 = vrot.slane %v367, %v1023
  %v1025 = vlaneseq
  %v1026 = vshrl.u32 %v1025, 7
  %v1027 = vsub.s32 0, %v1026
  %v1028 = vrot.slane %v350, %v1027
  %v1029 = vlaneseq
  %v1030 = vshrl.u32 %v1029, 7
  %v1031 = vsub.s32 0, %v1030
  %v1032 = vrot.slane %v364, %v1031
  %v1033 = vlaneseq
  %v1034 = vshrl.u32 %v1033, 7
  %v1035 = vsub.s32 0, %v1034
  %v1036 = vrot.slane %v366, %v1035
  %v1037 = vlaneseq
  %v1038 = vshrl.u32 %v1037, 7
  %v1039 = vsub.s32 0, %v1038
  %v1040 = vrot.slane %v368, %v1039
  %vm1049 = vcmp.eq.f32.partialorder %v372, %v1012
  %vm1050 = vcmp.eq.f32.partialorder %v377, %v1012
  %vm1051 = vcmp.eq.f32.partialorder %v382, %v1012
  %vm1052 = vcmp.eq.f32.partialorder %v387, %v1012
  %vm1053 = vcmp.eq.f32.partialorder %v392, %v1012
  %vm1054 = vcmp.eq.f32.partialorder %v397, %v1012
  %vm1055 = vcmp.eq.f32.partialorder %v402, %v1012
  %vm1056 = vcmp.eq.f32.partialorder %v407, %v1012
  %vm1057 = vcmp.eq.f32.partialorder %v412, %v1012
  %vm1058 = vcmp.eq.f32.partialorder %v417, %v1012
  %vm1059 = vcmp.eq.f32.partialorder %v422, %v1012
  %vm1060 = vcmp.eq.f32.partialorder %v427, %v1012
  %vm1061 = vcmp.eq.f32.partialorder %v432, %v1012
  %vm1062 = vcmp.eq.f32.partialorder %v437, %v1012
  %vm1063 = vcmp.eq.f32.partialorder %v442, %v1012
  %vm1064 = vcmp.eq.f32.partialorder %v447, %v1012
  %vm1065 = vcmp.eq.f32.partialorder %v452, %v1016
  %vm1066 = vcmp.eq.f32.partialorder %v457, %v1016
  %vm1067 = vcmp.eq.f32.partialorder %v462, %v1016
  %vm1068 = vcmp.eq.f32.partialorder %v467, %v1016
  %vm1069 = vcmp.eq.f32.partialorder %v472, %v1016
  %vm1070 = vcmp.eq.f32.partialorder %v477, %v1016
  %vm1071 = vcmp.eq.f32.partialorder %v482, %v1016
  %vm1072 = vcmp.eq.f32.partialorder %v487, %v1016
  %vm1073 = vcmp.eq.f32.partialorder %v492, %v1016
  %vm1074 = vcmp.eq.f32.partialorder %v497, %v1016
  %vm1075 = vcmp.eq.f32.partialorder %v502, %v1016
  %vm1076 = vcmp.eq.f32.partialorder %v507, %v1016
  %vm1077 = vcmp.eq.f32.partialorder %v512, %v1016
  %vm1078 = vcmp.eq.f32.partialorder %v517, %v1016
  %vm1079 = vcmp.eq.f32.partialorder %v522, %v1016
  %vm1080 = vcmp.eq.f32.partialorder %v527, %v1016
  %vm1081 = vcmp.eq.f32.partialorder %v532, %v1020
  %vm1082 = vcmp.eq.f32.partialorder %v537, %v1020
  %vm1083 = vcmp.eq.f32.partialorder %v542, %v1020
  %vm1084 = vcmp.eq.f32.partialorder %v547, %v1020
  %vm1085 = vcmp.eq.f32.partialorder %v552, %v1020
  %vm1086 = vcmp.eq.f32.partialorder %v557, %v1020
  %vm1087 = vcmp.eq.f32.partialorder %v562, %v1020
  %vm1088 = vcmp.eq.f32.partialorder %v567, %v1020
  %vm1089 = vcmp.eq.f32.partialorder %v572, %v1020
  %vm1090 = vcmp.eq.f32.partialorder %v577, %v1020
  %vm1091 = vcmp.eq.f32.partialorder %v582, %v1020
  %vm1092 = vcmp.eq.f32.partialorder %v587, %v1020
  %vm1093 = vcmp.eq.f32.partialorder %v592, %v1020
  %vm1094 = vcmp.eq.f32.partialorder %v597, %v1020
  %vm1095 = vcmp.eq.f32.partialorder %v602, %v1020
  %vm1096 = vcmp.eq.f32.partialorder %v607, %v1020
  %vm1097 = vcmp.eq.f32.partialorder %v612, %v1024
  %vm1098 = vcmp.eq.f32.partialorder %v617, %v1024
  %vm1099 = vcmp.eq.f32.partialorder %v622, %v1024
  %vm1100 = vcmp.eq.f32.partialorder %v627, %v1024
  %vm1101 = vcmp.eq.f32.partialorder %v632, %v1024
  %vm1102 = vcmp.eq.f32.partialorder %v637, %v1024
  %vm1103 = vcmp.eq.f32.partialorder %v642, %v1024
  %vm1104 = vcmp.eq.f32.partialorder %v647, %v1024
  %vm1105 = vcmp.eq.f32.partialorder %v652, %v1024
  %vm1106 = vcmp.eq.f32.partialorder %v657, %v1024
  %vm1107 = vcmp.eq.f32.partialorder %v662, %v1024
  %vm1108 = vcmp.eq.f32.partialorder %v667, %v1024
  %vm1109 = vcmp.eq.f32.partialorder %v672, %v1024
  %vm1110 = vcmp.eq.f32.partialorder %v677, %v1024
  %vm1111 = vcmp.eq.f32.partialorder %v682, %v1024
  %vm1112 = vcmp.eq.f32.partialorder %v687, %v1024
  %vm1113 = vcmp.eq.f32.partialorder %v692, %v1028
  %vm1114 = vcmp.eq.f32.partialorder %v697, %v1028
  %vm1115 = vcmp.eq.f32.partialorder %v702, %v1028
  %vm1116 = vcmp.eq.f32.partialorder %v707, %v1028
  %vm1117 = vcmp.eq.f32.partialorder %v712, %v1028
  %vm1118 = vcmp.eq.f32.partialorder %v717, %v1028
  %vm1119 = vcmp.eq.f32.partialorder %v722, %v1028
  %vm1120 = vcmp.eq.f32.partialorder %v727, %v1028
  %vm1121 = vcmp.eq.f32.partialorder %v732, %v1028
  %vm1122 = vcmp.eq.f32.partialorder %v737, %v1028
  %vm1123 = vcmp.eq.f32.partialorder %v742, %v1028
  %vm1124 = vcmp.eq.f32.partialorder %v747, %v1028
  %vm1125 = vcmp.eq.f32.partialorder %v752, %v1028
  %vm1126 = vcmp.eq.f32.partialorder %v757, %v1028
  %vm1127 = vcmp.eq.f32.partialorder %v762, %v1028
  %vm1128 = vcmp.eq.f32.partialorder %v767, %v1028
  %vm1129 = vcmp.eq.f32.partialorder %v772, %v1032
  %vm1130 = vcmp.eq.f32.partialorder %v777, %v1032
  %vm1131 = vcmp.eq.f32.partialorder %v782, %v1032
  %vm1132 = vcmp.eq.f32.partialorder %v787, %v1032
  %vm1133 = vcmp.eq.f32.partialorder %v792, %v1032
  %vm1134 = vcmp.eq.f32.partialorder %v797, %v1032
  %vm1135 = vcmp.eq.f32.partialorder %v802, %v1032
  %vm1136 = vcmp.eq.f32.partialorder %v807, %v1032
  %vm1137 = vcmp.eq.f32.partialorder %v812, %v1032
  %vm1138 = vcmp.eq.f32.partialorder %v817, %v1032
  %vm1139 = vcmp.eq.f32.partialorder %v822, %v1032
  %vm1140 = vcmp.eq.f32.partialorder %v827, %v1032
  %vm1141 = vcmp.eq.f32.partialorder %v832, %v1032
  %vm1142 = vcmp.eq.f32.partialorder %v837, %v1032
  %vm1143 = vcmp.eq.f32.partialorder %v842, %v1032
  %vm1144 = vcmp.eq.f32.partialorder %v847, %v1032
  %vm1145 = vcmp.eq.f32.partialorder %v852, %v1036
  %vm1146 = vcmp.eq.f32.partialorder %v857, %v1036
  %vm1147 = vcmp.eq.f32.partialorder %v862, %v1036
  %vm1148 = vcmp.eq.f32.partialorder %v867, %v1036
  %vm1149 = vcmp.eq.f32.partialorder %v872, %v1036
  %vm1150 = vcmp.eq.f32.partialorder %v877, %v1036
  %vm1151 = vcmp.eq.f32.partialorder %v882, %v1036
  %vm1152 = vcmp.eq.f32.partialorder %v887, %v1036
  %vm1153 = vcmp.eq.f32.partialorder %v892, %v1036
  %vm1154 = vcmp.eq.f32.partialorder %v897, %v1036
  %vm1155 = vcmp.eq.f32.partialorder %v902, %v1036
  %vm1156 = vcmp.eq.f32.partialorder %v907, %v1036
  %vm1157 = vcmp.eq.f32.partialorder %v912, %v1036
  %vm1158 = vcmp.eq.f32.partialorder %v917, %v1036
  %vm1159 = vcmp.eq.f32.partialorder %v922, %v1036
  %vm1160 = vcmp.eq.f32.partialorder %v927, %v1036
  %vm1161 = vcmp.eq.f32.partialorder %v932, %v1040
  %vm1162 = vcmp.eq.f32.partialorder %v937, %v1040
  %vm1163 = vcmp.eq.f32.partialorder %v942, %v1040
  %vm1164 = vcmp.eq.f32.partialorder %v947, %v1040
  %vm1165 = vcmp.eq.f32.partialorder %v952, %v1040
  %vm1166 = vcmp.eq.f32.partialorder %v957, %v1040
  %vm1167 = vcmp.eq.f32.partialorder %v962, %v1040
  %vm1168 = vcmp.eq.f32.partialorder %v967, %v1040
  %vm1169 = vcmp.eq.f32.partialorder %v972, %v1040
  %vm1170 = vcmp.eq.f32.partialorder %v977, %v1040
  %vm1171 = vcmp.eq.f32.partialorder %v982, %v1040
  %vm1172 = vcmp.eq.f32.partialorder %v987, %v1040
  %vm1173 = vcmp.eq.f32.partialorder %v992, %v1040
  %vm1174 = vcmp.eq.f32.partialorder %v997, %v1040
  %vm1175 = vcmp.eq.f32.partialorder %v1002, %v1040
  %vm1176 = vcmp.eq.f32.partialorder %v1007, %v1040
  %v1178 = vcombine.high %v318, %v318
  %v1180 = vunpack.c.l.s4 1966171168
  %v1181 = vunpack.c.0.s8 %v1180
  %v1182 = vlaneseq
  %v1183 = vshrl.u32 %v1182, 7
  %v1184 = vsub.s32 %v1181, %v1183
  %v1185 = vrot.slane %v318, %v1184
  %v1187 = vunpack.c.l.s4 1966171168
  %v1188 = vunpack.c.0.s8 %v1187
  %v1189 = vlaneseq
  %v1190 = vshrl.u32 %v1189, 7
  %v1191 = vsub.s32 %v1188, %v1190
  %v1192 = vrot.slane %v1178, %v1191
  %v1193 = vcombine.high %v1185, %v1185
  %v1194 = vcombine.high %v1192, %v1192
  %v1196 = vunpack.c.l.s4 1966171168
  %v1197 = vunpack.c.0.s8 %v1196
  %v1198 = vlaneseq
  %v1199 = vshrl.u32 %v1198, 7
  %v1200 = vsub.s32 %v1197, %v1199
  %v1201 = vrot.slane %v1185, %v1200
  %v1203 = vunpack.c.l.s4 1966171168
  %v1204 = vunpack.c.0.s8 %v1203
  %v1205 = vlaneseq
  %v1206 = vshrl.u32 %v1205, 7
  %v1207 = vsub.s32 %v1204, %v1206
  %v1208 = vrot.slane %v1192, %v1207
  %v1210 = vunpack.c.l.s4 1966171168
  %v1211 = vunpack.c.0.s8 %v1210
  %v1212 = vlaneseq
  %v1213 = vshrl.u32 %v1212, 7
  %v1214 = vsub.s32 %v1211, %v1213
  %v1215 = vrot.slane %v1193, %v1214
  %v1217 = vunpack.c.l.s4 1966171168
  %v1218 = vunpack.c.0.s8 %v1217
  %v1219 = vlaneseq
  %v1220 = vshrl.u32 %v1219, 7
  %v1221 = vsub.s32 %v1218, %v1220
  %v1222 = vrot.slane %v1194, %v1221
  %v1223 = vcombine.high %v1201, %v1201
  %v1224 = vcombine.high %v1208, %v1208
  %v1225 = vcombine.high %v1215, %v1215
  %v1226 = vcombine.high %v1222, %v1222
  %v1227 = vlaneseq
  %v1228 = vshrl.u32 %v1227, 7
  %v1229 = vsub.s32 0, %v1228
  %v1230 = vrot.slane %v1201, %v1229
  %v1231 = vlaneseq
  %v1232 = vshrl.u32 %v1231, 7
  %v1233 = vsub.s32 0, %v1232
  %v1234 = vrot.slane %v1215, %v1233
  %v1235 = vlaneseq
  %v1236 = vshrl.u32 %v1235, 7
  %v1237 = vsub.s32 0, %v1236
  %v1238 = vrot.slane %v1223, %v1237
  %v1239 = vlaneseq
  %v1240 = vshrl.u32 %v1239, 7
  %v1241 = vsub.s32 0, %v1240
  %v1242 = vrot.slane %v1225, %v1241
  %v1243 = vlaneseq
  %v1244 = vshrl.u32 %v1243, 7
  %v1245 = vsub.s32 0, %v1244
  %v1246 = vrot.slane %v1208, %v1245
  %v1247 = vlaneseq
  %v1248 = vshrl.u32 %v1247, 7
  %v1249 = vsub.s32 0, %v1248
  %v1250 = vrot.slane %v1222, %v1249
  %v1251 = vlaneseq
  %v1252 = vshrl.u32 %v1251, 7
  %v1253 = vsub.s32 0, %v1252
  %v1254 = vrot.slane %v1224, %v1253
  %v1255 = vlaneseq
  %v1256 = vshrl.u32 %v1255, 7
  %v1257 = vsub.s32 0, %v1256
  %v1258 = vrot.slane %v1226, %v1257
  %v1267 = vsel %vm1049, %v1230, -inf
  %v1268 = vsel %vm1050, %v1230, -inf
  %v1269 = vsel %vm1051, %v1230, -inf
  %v1270 = vsel %vm1052, %v1230, -inf
  %v1271 = vsel %vm1053, %v1230, -inf
  %v1272 = vsel %vm1054, %v1230, -inf
  %v1273 = vsel %vm1055, %v1230, -inf
  %v1274 = vsel %vm1056, %v1230, -inf
  %v1275 = vsel %vm1057, %v1230, -inf
  %v1276 = vsel %vm1058, %v1230, -inf
  %v1277 = vsel %vm1059, %v1230, -inf
  %v1278 = vsel %vm1060, %v1230, -inf
  %v1279 = vsel %vm1061, %v1230, -inf
  %v1280 = vsel %vm1062, %v1230, -inf
  %v1281 = vsel %vm1063, %v1230, -inf
  %v1282 = vsel %vm1064, %v1230, -inf
  %v1283 = vsel %vm1065, %v1234, -inf
  %v1284 = vsel %vm1066, %v1234, -inf
  %v1285 = vsel %vm1067, %v1234, -inf
  %v1286 = vsel %vm1068, %v1234, -inf
  %v1287 = vsel %vm1069, %v1234, -inf
  %v1288 = vsel %vm1070, %v1234, -inf
  %v1289 = vsel %vm1071, %v1234, -inf
  %v1290 = vsel %vm1072, %v1234, -inf
  %v1291 = vsel %vm1073, %v1234, -inf
  %v1292 = vsel %vm1074, %v1234, -inf
  %v1293 = vsel %vm1075, %v1234, -inf
  %v1294 = vsel %vm1076, %v1234, -inf
  %v1295 = vsel %vm1077, %v1234, -inf
  %v1296 = vsel %vm1078, %v1234, -inf
  %v1297 = vsel %vm1079, %v1234, -inf
  %v1298 = vsel %vm1080, %v1234, -inf
  %v1299 = vsel %vm1081, %v1238, -inf
  %v1300 = vsel %vm1082, %v1238, -inf
  %v1301 = vsel %vm1083, %v1238, -inf
  %v1302 = vsel %vm1084, %v1238, -inf
  %v1303 = vsel %vm1085, %v1238, -inf
  %v1304 = vsel %vm1086, %v1238, -inf
  %v1305 = vsel %vm1087, %v1238, -inf
  %v1306 = vsel %vm1088, %v1238, -inf
  %v1307 = vsel %vm1089, %v1238, -inf
  %v1308 = vsel %vm1090, %v1238, -inf
  %v1309 = vsel %vm1091, %v1238, -inf
  %v1310 = vsel %vm1092, %v1238, -inf
  %v1311 = vsel %vm1093, %v1238, -inf
  %v1312 = vsel %vm1094, %v1238, -inf
  %v1313 = vsel %vm1095, %v1238, -inf
  %v1314 = vsel %vm1096, %v1238, -inf
  %v1315 = vsel %vm1097, %v1242, -inf
  %v1316 = vsel %vm1098, %v1242, -inf
  %v1317 = vsel %vm1099, %v1242, -inf
  %v1318 = vsel %vm1100, %v1242, -inf
  %v1319 = vsel %vm1101, %v1242, -inf
  %v1320 = vsel %vm1102, %v1242, -inf
  %v1321 = vsel %vm1103, %v1242, -inf
  %v1322 = vsel %vm1104, %v1242, -inf
  %v1323 = vsel %vm1105, %v1242, -inf
  %v1324 = vsel %vm1106, %v1242, -inf
  %v1325 = vsel %vm1107, %v1242, -inf
  %v1326 = vsel %vm1108, %v1242, -inf
  %v1327 = vsel %vm1109, %v1242, -inf
  %v1328 = vsel %vm1110, %v1242, -inf
  %v1329 = vsel %vm1111, %v1242, -inf
  %v1330 = vsel %vm1112, %v1242, -inf
  %v1331 = vsel %vm1113, %v1246, -inf
  %v1332 = vsel %vm1114, %v1246, -inf
  %v1333 = vsel %vm1115, %v1246, -inf
  %v1334 = vsel %vm1116, %v1246, -inf
  %v1335 = vsel %vm1117, %v1246, -inf
  %v1336 = vsel %vm1118, %v1246, -inf
  %v1337 = vsel %vm1119, %v1246, -inf
  %v1338 = vsel %vm1120, %v1246, -inf
  %v1339 = vsel %vm1121, %v1246, -inf
  %v1340 = vsel %vm1122, %v1246, -inf
  %v1341 = vsel %vm1123, %v1246, -inf
  %v1342 = vsel %vm1124, %v1246, -inf
  %v1343 = vsel %vm1125, %v1246, -inf
  %v1344 = vsel %vm1126, %v1246, -inf
  %v1345 = vsel %vm1127, %v1246, -inf
  %v1346 = vsel %vm1128, %v1246, -inf
  %v1347 = vsel %vm1129, %v1250, -inf
  %v1348 = vsel %vm1130, %v1250, -inf
  %v1349 = vsel %vm1131, %v1250, -inf
  %v1350 = vsel %vm1132, %v1250, -inf
  %v1351 = vsel %vm1133, %v1250, -inf
  %v1352 = vsel %vm1134, %v1250, -inf
  %v1353 = vsel %vm1135, %v1250, -inf
  %v1354 = vsel %vm1136, %v1250, -inf
  %v1355 = vsel %vm1137, %v1250, -inf
  %v1356 = vsel %vm1138, %v1250, -inf
  %v1357 = vsel %vm1139, %v1250, -inf
  %v1358 = vsel %vm1140, %v1250, -inf
  %v1359 = vsel %vm1141, %v1250, -inf
  %v1360 = vsel %vm1142, %v1250, -inf
  %v1361 = vsel %vm1143, %v1250, -inf
  %v1362 = vsel %vm1144, %v1250, -inf
  %v1363 = vsel %vm1145, %v1254, -inf
  %v1364 = vsel %vm1146, %v1254, -inf
  %v1365 = vsel %vm1147, %v1254, -inf
  %v1366 = vsel %vm1148, %v1254, -inf
  %v1367 = vsel %vm1149, %v1254, -inf
  %v1368 = vsel %vm1150, %v1254, -inf
  %v1369 = vsel %vm1151, %v1254, -inf
  %v1370 = vsel %vm1152, %v1254, -inf
  %v1371 = vsel %vm1153, %v1254, -inf
  %v1372 = vsel %vm1154, %v1254, -inf
  %v1373 = vsel %vm1155, %v1254, -inf
  %v1374 = vsel %vm1156, %v1254, -inf
  %v1375 = vsel %vm1157, %v1254, -inf
  %v1376 = vsel %vm1158, %v1254, -inf
  %v1377 = vsel %vm1159, %v1254, -inf
  %v1378 = vsel %vm1160, %v1254, -inf
  %v1379 = vsel %vm1161, %v1258, -inf
  %v1380 = vsel %vm1162, %v1258, -inf
  %v1381 = vsel %vm1163, %v1258, -inf
  %v1382 = vsel %vm1164, %v1258, -inf
  %v1383 = vsel %vm1165, %v1258, -inf
  %v1384 = vsel %vm1166, %v1258, -inf
  %v1385 = vsel %vm1167, %v1258, -inf
  %v1386 = vsel %vm1168, %v1258, -inf
  %v1387 = vsel %vm1169, %v1258, -inf
  %v1388 = vsel %vm1170, %v1258, -inf
  %v1389 = vsel %vm1171, %v1258, -inf
  %v1390 = vsel %vm1172, %v1258, -inf
  %v1391 = vsel %vm1173, %v1258, -inf
  %v1392 = vsel %vm1174, %v1258, -inf
  %v1393 = vsel %vm1175, %v1258, -inf
  %v1394 = vsel %vm1176, %v1258, -inf
  %1395 = vmax.xlane.f32.xlu0 %v1267
  %v1396 = vpop.xlane.xlu0 %1395
  %1397 = vmax.xlane.f32.xlu0 %v1268
  %v1398 = vpop.xlane.xlu0 %1397
  %1399 = vmax.xlane.f32.xlu0 %v1269
  %v1400 = vpop.xlane.xlu0 %1399
  %1401 = vmax.xlane.f32.xlu0 %v1270
  %v1402 = vpop.xlane.xlu0 %1401
  %1403 = vmax.xlane.f32.xlu0 %v1271
  %v1404 = vpop.xlane.xlu0 %1403
  %1405 = vmax.xlane.f32.xlu0 %v1272
  %v1406 = vpop.xlane.xlu0 %1405
  %1407 = vmax.xlane.f32.xlu0 %v1273
  %v1408 = vpop.xlane.xlu0 %1407
  %1409 = vmax.xlane.f32.xlu0 %v1274
  %v1410 = vpop.xlane.xlu0 %1409
  %1411 = vmax.xlane.f32.xlu0 %v1275
  %v1412 = vpop.xlane.xlu0 %1411
  %1413 = vmax.xlane.f32.xlu0 %v1276
  %v1414 = vpop.xlane.xlu0 %1413
  %1415 = vmax.xlane.f32.xlu0 %v1277
  %v1416 = vpop.xlane.xlu0 %1415
  %1417 = vmax.xlane.f32.xlu0 %v1278
  %v1418 = vpop.xlane.xlu0 %1417
  %1419 = vmax.xlane.f32.xlu0 %v1279
  %v1420 = vpop.xlane.xlu0 %1419
  %1421 = vmax.xlane.f32.xlu0 %v1280
  %v1422 = vpop.xlane.xlu0 %1421
  %1423 = vmax.xlane.f32.xlu0 %v1281
  %v1424 = vpop.xlane.xlu0 %1423
  %1425 = vmax.xlane.f32.xlu0 %v1282
  %v1426 = vpop.xlane.xlu0 %1425
  %1427 = vmax.xlane.f32.xlu0 %v1283
  %v1428 = vpop.xlane.xlu0 %1427
  %1429 = vmax.xlane.f32.xlu0 %v1284
  %v1430 = vpop.xlane.xlu0 %1429
  %1431 = vmax.xlane.f32.xlu0 %v1285
  %v1432 = vpop.xlane.xlu0 %1431
  %1433 = vmax.xlane.f32.xlu0 %v1286
  %v1434 = vpop.xlane.xlu0 %1433
  %1435 = vmax.xlane.f32.xlu0 %v1287
  %v1436 = vpop.xlane.xlu0 %1435
  %1437 = vmax.xlane.f32.xlu0 %v1288
  %v1438 = vpop.xlane.xlu0 %1437
  %1439 = vmax.xlane.f32.xlu0 %v1289
  %v1440 = vpop.xlane.xlu0 %1439
  %1441 = vmax.xlane.f32.xlu0 %v1290
  %v1442 = vpop.xlane.xlu0 %1441
  %1443 = vmax.xlane.f32.xlu0 %v1291
  %v1444 = vpop.xlane.xlu0 %1443
  %1445 = vmax.xlane.f32.xlu0 %v1292
  %v1446 = vpop.xlane.xlu0 %1445
  %1447 = vmax.xlane.f32.xlu0 %v1293
  %v1448 = vpop.xlane.xlu0 %1447
  %1449 = vmax.xlane.f32.xlu0 %v1294
  %v1450 = vpop.xlane.xlu0 %1449
  %1451 = vmax.xlane.f32.xlu0 %v1295
  %v1452 = vpop.xlane.xlu0 %1451
  %1453 = vmax.xlane.f32.xlu0 %v1296
  %v1454 = vpop.xlane.xlu0 %1453
  %1455 = vmax.xlane.f32.xlu0 %v1297
  %v1456 = vpop.xlane.xlu0 %1455
  %1457 = vmax.xlane.f32.xlu0 %v1298
  %v1458 = vpop.xlane.xlu0 %1457
  %1459 = vmax.xlane.f32.xlu0 %v1299
  %v1460 = vpop.xlane.xlu0 %1459
  %1461 = vmax.xlane.f32.xlu0 %v1300
  %v1462 = vpop.xlane.xlu0 %1461
  %1463 = vmax.xlane.f32.xlu0 %v1301
  %v1464 = vpop.xlane.xlu0 %1463
  %1465 = vmax.xlane.f32.xlu0 %v1302
  %v1466 = vpop.xlane.xlu0 %1465
  %1467 = vmax.xlane.f32.xlu0 %v1303
  %v1468 = vpop.xlane.xlu0 %1467
  %1469 = vmax.xlane.f32.xlu0 %v1304
  %v1470 = vpop.xlane.xlu0 %1469
  %1471 = vmax.xlane.f32.xlu0 %v1305
  %v1472 = vpop.xlane.xlu0 %1471
  %1473 = vmax.xlane.f32.xlu0 %v1306
  %v1474 = vpop.xlane.xlu0 %1473
  %1475 = vmax.xlane.f32.xlu0 %v1307
  %v1476 = vpop.xlane.xlu0 %1475
  %1477 = vmax.xlane.f32.xlu0 %v1308
  %v1478 = vpop.xlane.xlu0 %1477
  %1479 = vmax.xlane.f32.xlu0 %v1309
  %v1480 = vpop.xlane.xlu0 %1479
  %1481 = vmax.xlane.f32.xlu0 %v1310
  %v1482 = vpop.xlane.xlu0 %1481
  %1483 = vmax.xlane.f32.xlu0 %v1311
  %v1484 = vpop.xlane.xlu0 %1483
  %1485 = vmax.xlane.f32.xlu0 %v1312
  %v1486 = vpop.xlane.xlu0 %1485
  %1487 = vmax.xlane.f32.xlu0 %v1313
  %v1488 = vpop.xlane.xlu0 %1487
  %1489 = vmax.xlane.f32.xlu0 %v1314
  %v1490 = vpop.xlane.xlu0 %1489
  %1491 = vmax.xlane.f32.xlu0 %v1315
  %v1492 = vpop.xlane.xlu0 %1491
  %1493 = vmax.xlane.f32.xlu0 %v1316
  %v1494 = vpop.xlane.xlu0 %1493
  %1495 = vmax.xlane.f32.xlu0 %v1317
  %v1496 = vpop.xlane.xlu0 %1495
  %1497 = vmax.xlane.f32.xlu0 %v1318
  %v1498 = vpop.xlane.xlu0 %1497
  %1499 = vmax.xlane.f32.xlu0 %v1319
  %v1500 = vpop.xlane.xlu0 %1499
  %1501 = vmax.xlane.f32.xlu0 %v1320
  %v1502 = vpop.xlane.xlu0 %1501
  %1503 = vmax.xlane.f32.xlu0 %v1321
  %v1504 = vpop.xlane.xlu0 %1503
  %1505 = vmax.xlane.f32.xlu0 %v1322
  %v1506 = vpop.xlane.xlu0 %1505
  %1507 = vmax.xlane.f32.xlu0 %v1323
  %v1508 = vpop.xlane.xlu0 %1507
  %1509 = vmax.xlane.f32.xlu0 %v1324
  %v1510 = vpop.xlane.xlu0 %1509
  %1511 = vmax.xlane.f32.xlu0 %v1325
  %v1512 = vpop.xlane.xlu0 %1511
  %1513 = vmax.xlane.f32.xlu0 %v1326
  %v1514 = vpop.xlane.xlu0 %1513
  %1515 = vmax.xlane.f32.xlu0 %v1327
  %v1516 = vpop.xlane.xlu0 %1515
  %1517 = vmax.xlane.f32.xlu0 %v1328
  %v1518 = vpop.xlane.xlu0 %1517
  %1519 = vmax.xlane.f32.xlu0 %v1329
  %v1520 = vpop.xlane.xlu0 %1519
  %1521 = vmax.xlane.f32.xlu0 %v1330
  %v1522 = vpop.xlane.xlu0 %1521
  %1523 = vmax.xlane.f32.xlu0 %v1331
  %v1524 = vpop.xlane.xlu0 %1523
  %1525 = vmax.xlane.f32.xlu0 %v1332
  %v1526 = vpop.xlane.xlu0 %1525
  %1527 = vmax.xlane.f32.xlu0 %v1333
  %v1528 = vpop.xlane.xlu0 %1527
  %1529 = vmax.xlane.f32.xlu0 %v1334
  %v1530 = vpop.xlane.xlu0 %1529
  %1531 = vmax.xlane.f32.xlu0 %v1335
  %v1532 = vpop.xlane.xlu0 %1531
  %1533 = vmax.xlane.f32.xlu0 %v1336
  %v1534 = vpop.xlane.xlu0 %1533
  %1535 = vmax.xlane.f32.xlu0 %v1337
  %v1536 = vpop.xlane.xlu0 %1535
  %1537 = vmax.xlane.f32.xlu0 %v1338
  %v1538 = vpop.xlane.xlu0 %1537
  %1539 = vmax.xlane.f32.xlu0 %v1339
  %v1540 = vpop.xlane.xlu0 %1539
  %1541 = vmax.xlane.f32.xlu0 %v1340
  %v1542 = vpop.xlane.xlu0 %1541
  %1543 = vmax.xlane.f32.xlu0 %v1341
  %v1544 = vpop.xlane.xlu0 %1543
  %1545 = vmax.xlane.f32.xlu0 %v1342
  %v1546 = vpop.xlane.xlu0 %1545
  %1547 = vmax.xlane.f32.xlu0 %v1343
  %v1548 = vpop.xlane.xlu0 %1547
  %1549 = vmax.xlane.f32.xlu0 %v1344
  %v1550 = vpop.xlane.xlu0 %1549
  %1551 = vmax.xlane.f32.xlu0 %v1345
  %v1552 = vpop.xlane.xlu0 %1551
  %1553 = vmax.xlane.f32.xlu0 %v1346
  %v1554 = vpop.xlane.xlu0 %1553
  %1555 = vmax.xlane.f32.xlu0 %v1347
  %v1556 = vpop.xlane.xlu0 %1555
  %1557 = vmax.xlane.f32.xlu0 %v1348
  %v1558 = vpop.xlane.xlu0 %1557
  %1559 = vmax.xlane.f32.xlu0 %v1349
  %v1560 = vpop.xlane.xlu0 %1559
  %1561 = vmax.xlane.f32.xlu0 %v1350
  %v1562 = vpop.xlane.xlu0 %1561
  %1563 = vmax.xlane.f32.xlu0 %v1351
  %v1564 = vpop.xlane.xlu0 %1563
  %1565 = vmax.xlane.f32.xlu0 %v1352
  %v1566 = vpop.xlane.xlu0 %1565
  %1567 = vmax.xlane.f32.xlu0 %v1353
  %v1568 = vpop.xlane.xlu0 %1567
  %1569 = vmax.xlane.f32.xlu0 %v1354
  %v1570 = vpop.xlane.xlu0 %1569
  %1571 = vmax.xlane.f32.xlu0 %v1355
  %v1572 = vpop.xlane.xlu0 %1571
  %1573 = vmax.xlane.f32.xlu0 %v1356
  %v1574 = vpop.xlane.xlu0 %1573
  %1575 = vmax.xlane.f32.xlu0 %v1357
  %v1576 = vpop.xlane.xlu0 %1575
  %1577 = vmax.xlane.f32.xlu0 %v1358
  %v1578 = vpop.xlane.xlu0 %1577
  %1579 = vmax.xlane.f32.xlu0 %v1359
  %v1580 = vpop.xlane.xlu0 %1579
  %1581 = vmax.xlane.f32.xlu0 %v1360
  %v1582 = vpop.xlane.xlu0 %1581
  %1583 = vmax.xlane.f32.xlu0 %v1361
  %v1584 = vpop.xlane.xlu0 %1583
  %1585 = vmax.xlane.f32.xlu0 %v1362
  %v1586 = vpop.xlane.xlu0 %1585
  %1587 = vmax.xlane.f32.xlu0 %v1363
  %v1588 = vpop.xlane.xlu0 %1587
  %1589 = vmax.xlane.f32.xlu0 %v1364
  %v1590 = vpop.xlane.xlu0 %1589
  %1591 = vmax.xlane.f32.xlu0 %v1365
  %v1592 = vpop.xlane.xlu0 %1591
  %1593 = vmax.xlane.f32.xlu0 %v1366
  %v1594 = vpop.xlane.xlu0 %1593
  %1595 = vmax.xlane.f32.xlu0 %v1367
  %v1596 = vpop.xlane.xlu0 %1595
  %1597 = vmax.xlane.f32.xlu0 %v1368
  %v1598 = vpop.xlane.xlu0 %1597
  %1599 = vmax.xlane.f32.xlu0 %v1369
  %v1600 = vpop.xlane.xlu0 %1599
  %1601 = vmax.xlane.f32.xlu0 %v1370
  %v1602 = vpop.xlane.xlu0 %1601
  %1603 = vmax.xlane.f32.xlu0 %v1371
  %v1604 = vpop.xlane.xlu0 %1603
  %1605 = vmax.xlane.f32.xlu0 %v1372
  %v1606 = vpop.xlane.xlu0 %1605
  %1607 = vmax.xlane.f32.xlu0 %v1373
  %v1608 = vpop.xlane.xlu0 %1607
  %1609 = vmax.xlane.f32.xlu0 %v1374
  %v1610 = vpop.xlane.xlu0 %1609
  %1611 = vmax.xlane.f32.xlu0 %v1375
  %v1612 = vpop.xlane.xlu0 %1611
  %1613 = vmax.xlane.f32.xlu0 %v1376
  %v1614 = vpop.xlane.xlu0 %1613
  %1615 = vmax.xlane.f32.xlu0 %v1377
  %v1616 = vpop.xlane.xlu0 %1615
  %1617 = vmax.xlane.f32.xlu0 %v1378
  %v1618 = vpop.xlane.xlu0 %1617
  %1619 = vmax.xlane.f32.xlu0 %v1379
  %v1620 = vpop.xlane.xlu0 %1619
  %1621 = vmax.xlane.f32.xlu0 %v1380
  %v1622 = vpop.xlane.xlu0 %1621
  %1623 = vmax.xlane.f32.xlu0 %v1381
  %v1624 = vpop.xlane.xlu0 %1623
  %1625 = vmax.xlane.f32.xlu0 %v1382
  %v1626 = vpop.xlane.xlu0 %1625
  %1627 = vmax.xlane.f32.xlu0 %v1383
  %v1628 = vpop.xlane.xlu0 %1627
  %1629 = vmax.xlane.f32.xlu0 %v1384
  %v1630 = vpop.xlane.xlu0 %1629
  %1631 = vmax.xlane.f32.xlu0 %v1385
  %v1632 = vpop.xlane.xlu0 %1631
  %1633 = vmax.xlane.f32.xlu0 %v1386
  %v1634 = vpop.xlane.xlu0 %1633
  %1635 = vmax.xlane.f32.xlu0 %v1387
  %v1636 = vpop.xlane.xlu0 %1635
  %1637 = vmax.xlane.f32.xlu0 %v1388
  %v1638 = vpop.xlane.xlu0 %1637
  %1639 = vmax.xlane.f32.xlu0 %v1389
  %v1640 = vpop.xlane.xlu0 %1639
  %1641 = vmax.xlane.f32.xlu0 %v1390
  %v1642 = vpop.xlane.xlu0 %1641
  %1643 = vmax.xlane.f32.xlu0 %v1391
  %v1644 = vpop.xlane.xlu0 %1643
  %1645 = vmax.xlane.f32.xlu0 %v1392
  %v1646 = vpop.xlane.xlu0 %1645
  %1647 = vmax.xlane.f32.xlu0 %v1393
  %v1648 = vpop.xlane.xlu0 %1647
  %1649 = vmax.xlane.f32.xlu0 %v1394
  %v1650 = vpop.xlane.xlu0 %1649
  %v1651 = vmax.f32 %v1396, 0.0
  %v1652 = vmax.f32 %v1398, 0.0
  %v1653 = vmax.f32 %v1400, 0.0
  %v1654 = vmax.f32 %v1402, 0.0
  %v1655 = vmax.f32 %v1404, 0.0
  %v1656 = vmax.f32 %v1406, 0.0
  %v1657 = vmax.f32 %v1408, 0.0
  %v1658 = vmax.f32 %v1410, 0.0
  %v1659 = vmax.f32 %v1412, 0.0
  %v1660 = vmax.f32 %v1414, 0.0
  %v1661 = vmax.f32 %v1416, 0.0
  %v1662 = vmax.f32 %v1418, 0.0
  %v1663 = vmax.f32 %v1420, 0.0
  %v1664 = vmax.f32 %v1422, 0.0
  %v1665 = vmax.f32 %v1424, 0.0
  %v1666 = vmax.f32 %v1426, 0.0
  %v1667 = vmax.f32 %v1428, 0.0
  %v1668 = vmax.f32 %v1430, 0.0
  %v1669 = vmax.f32 %v1432, 0.0
  %v1670 = vmax.f32 %v1434, 0.0
  %v1671 = vmax.f32 %v1436, 0.0
  %v1672 = vmax.f32 %v1438, 0.0
  %v1673 = vmax.f32 %v1440, 0.0
  %v1674 = vmax.f32 %v1442, 0.0
  %v1675 = vmax.f32 %v1444, 0.0
  %v1676 = vmax.f32 %v1446, 0.0
  %v1677 = vmax.f32 %v1448, 0.0
  %v1678 = vmax.f32 %v1450, 0.0
  %v1679 = vmax.f32 %v1452, 0.0
  %v1680 = vmax.f32 %v1454, 0.0
  %v1681 = vmax.f32 %v1456, 0.0
  %v1682 = vmax.f32 %v1458, 0.0
  %v1683 = vmax.f32 %v1460, 0.0
  %v1684 = vmax.f32 %v1462, 0.0
  %v1685 = vmax.f32 %v1464, 0.0
  %v1686 = vmax.f32 %v1466, 0.0
  %v1687 = vmax.f32 %v1468, 0.0
  %v1688 = vmax.f32 %v1470, 0.0
  %v1689 = vmax.f32 %v1472, 0.0
  %v1690 = vmax.f32 %v1474, 0.0
  %v1691 = vmax.f32 %v1476, 0.0
  %v1692 = vmax.f32 %v1478, 0.0
  %v1693 = vmax.f32 %v1480, 0.0
  %v1694 = vmax.f32 %v1482, 0.0
  %v1695 = vmax.f32 %v1484, 0.0
  %v1696 = vmax.f32 %v1486, 0.0
  %v1697 = vmax.f32 %v1488, 0.0
  %v1698 = vmax.f32 %v1490, 0.0
  %v1699 = vmax.f32 %v1492, 0.0
  %v1700 = vmax.f32 %v1494, 0.0
  %v1701 = vmax.f32 %v1496, 0.0
  %v1702 = vmax.f32 %v1498, 0.0
  %v1703 = vmax.f32 %v1500, 0.0
  %v1704 = vmax.f32 %v1502, 0.0
  %v1705 = vmax.f32 %v1504, 0.0
  %v1706 = vmax.f32 %v1506, 0.0
  %v1707 = vmax.f32 %v1508, 0.0
  %v1708 = vmax.f32 %v1510, 0.0
  %v1709 = vmax.f32 %v1512, 0.0
  %v1710 = vmax.f32 %v1514, 0.0
  %v1711 = vmax.f32 %v1516, 0.0
  %v1712 = vmax.f32 %v1518, 0.0
  %v1713 = vmax.f32 %v1520, 0.0
  %v1714 = vmax.f32 %v1522, 0.0
  %v1715 = vmax.f32 %v1524, 0.0
  %v1716 = vmax.f32 %v1526, 0.0
  %v1717 = vmax.f32 %v1528, 0.0
  %v1718 = vmax.f32 %v1530, 0.0
  %v1719 = vmax.f32 %v1532, 0.0
  %v1720 = vmax.f32 %v1534, 0.0
  %v1721 = vmax.f32 %v1536, 0.0
  %v1722 = vmax.f32 %v1538, 0.0
  %v1723 = vmax.f32 %v1540, 0.0
  %v1724 = vmax.f32 %v1542, 0.0
  %v1725 = vmax.f32 %v1544, 0.0
  %v1726 = vmax.f32 %v1546, 0.0
  %v1727 = vmax.f32 %v1548, 0.0
  %v1728 = vmax.f32 %v1550, 0.0
  %v1729 = vmax.f32 %v1552, 0.0
  %v1730 = vmax.f32 %v1554, 0.0
  %v1731 = vmax.f32 %v1556, 0.0
  %v1732 = vmax.f32 %v1558, 0.0
  %v1733 = vmax.f32 %v1560, 0.0
  %v1734 = vmax.f32 %v1562, 0.0
  %v1735 = vmax.f32 %v1564, 0.0
  %v1736 = vmax.f32 %v1566, 0.0
  %v1737 = vmax.f32 %v1568, 0.0
  %v1738 = vmax.f32 %v1570, 0.0
  %v1739 = vmax.f32 %v1572, 0.0
  %v1740 = vmax.f32 %v1574, 0.0
  %v1741 = vmax.f32 %v1576, 0.0
  %v1742 = vmax.f32 %v1578, 0.0
  %v1743 = vmax.f32 %v1580, 0.0
  %v1744 = vmax.f32 %v1582, 0.0
  %v1745 = vmax.f32 %v1584, 0.0
  %v1746 = vmax.f32 %v1586, 0.0
  %v1747 = vmax.f32 %v1588, 0.0
  %v1748 = vmax.f32 %v1590, 0.0
  %v1749 = vmax.f32 %v1592, 0.0
  %v1750 = vmax.f32 %v1594, 0.0
  %v1751 = vmax.f32 %v1596, 0.0
  %v1752 = vmax.f32 %v1598, 0.0
  %v1753 = vmax.f32 %v1600, 0.0
  %v1754 = vmax.f32 %v1602, 0.0
  %v1755 = vmax.f32 %v1604, 0.0
  %v1756 = vmax.f32 %v1606, 0.0
  %v1757 = vmax.f32 %v1608, 0.0
  %v1758 = vmax.f32 %v1610, 0.0
  %v1759 = vmax.f32 %v1612, 0.0
  %v1760 = vmax.f32 %v1614, 0.0
  %v1761 = vmax.f32 %v1616, 0.0
  %v1762 = vmax.f32 %v1618, 0.0
  %v1763 = vmax.f32 %v1620, 0.0
  %v1764 = vmax.f32 %v1622, 0.0
  %v1765 = vmax.f32 %v1624, 0.0
  %v1766 = vmax.f32 %v1626, 0.0
  %v1767 = vmax.f32 %v1628, 0.0
  %v1768 = vmax.f32 %v1630, 0.0
  %v1769 = vmax.f32 %v1632, 0.0
  %v1770 = vmax.f32 %v1634, 0.0
  %v1771 = vmax.f32 %v1636, 0.0
  %v1772 = vmax.f32 %v1638, 0.0
  %v1773 = vmax.f32 %v1640, 0.0
  %v1774 = vmax.f32 %v1642, 0.0
  %v1775 = vmax.f32 %v1644, 0.0
  %v1776 = vmax.f32 %v1646, 0.0
  %v1777 = vmax.f32 %v1648, 0.0
  %v1778 = vmax.f32 %v1650, 0.0
  %v1907 = vlaneseq
  %v1908 = vand.u32 %v1907, 127
  %v1909 = vlaneseq
  %v1910 = vshrl.u32 %v1909, 7
  %v1911 = vsub.s32 %v1908, %v1910
  %v1912 = vrot.slane %v1651, %v1911
  %v1913 = vadd.s32 %v1908, 4294967288
  %v1914 = vlaneseq
  %v1915 = vshrl.u32 %v1914, 7
  %v1916 = vsub.s32 %v1913, %v1915
  %v1917 = vrot.slane %v1652, %v1916
  %vm1918 = vcmask 130112
  %v1919 = vsel %vm1918, %v1917, %v1912
  %v1920 = vadd.s32 %v1908, 4294967280
  %v1921 = vlaneseq
  %v1922 = vshrl.u32 %v1921, 7
  %v1923 = vsub.s32 %v1920, %v1922
  %v1924 = vrot.slane %v1653, %v1923
  %vm1925 = vcmask 195712
  %v1926 = vsel %vm1925, %v1924, %v1919
  %v1927 = vadd.s32 %v1908, 4294967272
  %v1928 = vlaneseq
  %v1929 = vshrl.u32 %v1928, 7
  %v1930 = vsub.s32 %v1927, %v1929
  %v1931 = vrot.slane %v1654, %v1930
  %vm1932 = vcmask 261312
  %v1933 = vsel %vm1932, %v1931, %v1926
  %v1934 = vadd.s32 %v1908, 4294967264
  %v1935 = vlaneseq
  %v1936 = vshrl.u32 %v1935, 7
  %v1937 = vsub.s32 %v1934, %v1936
  %v1938 = vrot.slane %v1655, %v1937
  %vm1939 = vcmask 326912
  %v1940 = vsel %vm1939, %v1938, %v1933
  %v1941 = vadd.s32 %v1908, 4294967256
  %v1942 = vlaneseq
  %v1943 = vshrl.u32 %v1942, 7
  %v1944 = vsub.s32 %v1941, %v1943
  %v1945 = vrot.slane %v1656, %v1944
  %vm1946 = vcmask 392512
  %v1947 = vsel %vm1946, %v1945, %v1940
  %v1948 = vadd.s32 %v1908, 4294967248
  %v1949 = vlaneseq
  %v1950 = vshrl.u32 %v1949, 7
  %v1951 = vsub.s32 %v1948, %v1950
  %v1952 = vrot.slane %v1657, %v1951
  %vm1953 = vcmask 458112
  %v1954 = vsel %vm1953, %v1952, %v1947
  %v1955 = vadd.s32 %v1908, 4294967240
  %v1956 = vlaneseq
  %v1957 = vshrl.u32 %v1956, 7
  %v1958 = vsub.s32 %v1955, %v1957
  %v1959 = vrot.slane %v1658, %v1958
  %vm1960 = vcmask 523712
  %v1961 = vsel %vm1960, %v1959, %v1954
  %v1962 = vadd.s32 %v1908, 4294967232
  %v1963 = vlaneseq
  %v1964 = vshrl.u32 %v1963, 7
  %v1965 = vsub.s32 %v1962, %v1964
  %v1966 = vrot.slane %v1659, %v1965
  %vm1967 = vcmask 589312
  %v1968 = vsel %vm1967, %v1966, %v1961
  %v1969 = vadd.s32 %v1908, 4294967224
  %v1970 = vlaneseq
  %v1971 = vshrl.u32 %v1970, 7
  %v1972 = vsub.s32 %v1969, %v1971
  %v1973 = vrot.slane %v1660, %v1972
  %vm1974 = vcmask 654912
  %v1975 = vsel %vm1974, %v1973, %v1968
  %v1976 = vadd.s32 %v1908, 4294967216
  %v1977 = vlaneseq
  %v1978 = vshrl.u32 %v1977, 7
  %v1979 = vsub.s32 %v1976, %v1978
  %v1980 = vrot.slane %v1661, %v1979
  %vm1981 = vcmask 720512
  %v1982 = vsel %vm1981, %v1980, %v1975
  %v1983 = vadd.s32 %v1908, 4294967208
  %v1984 = vlaneseq
  %v1985 = vshrl.u32 %v1984, 7
  %v1986 = vsub.s32 %v1983, %v1985
  %v1987 = vrot.slane %v1662, %v1986
  %vm1988 = vcmask 786112
  %v1989 = vsel %vm1988, %v1987, %v1982
  %v1990 = vadd.s32 %v1908, 4294967200
  %v1991 = vlaneseq
  %v1992 = vshrl.u32 %v1991, 7
  %v1993 = vsub.s32 %v1990, %v1992
  %v1994 = vrot.slane %v1663, %v1993
  %vm1995 = vcmask 851712
  %v1996 = vsel %vm1995, %v1994, %v1989
  %v1997 = vadd.s32 %v1908, 4294967192
  %v1998 = vlaneseq
  %v1999 = vshrl.u32 %v1998, 7
  %v2000 = vsub.s32 %v1997, %v1999
  %v2001 = vrot.slane %v1664, %v2000
  %vm2002 = vcmask 917312
  %v2003 = vsel %vm2002, %v2001, %v1996
  %v2004 = vadd.s32 %v1908, 4294967184
  %v2005 = vlaneseq
  %v2006 = vshrl.u32 %v2005, 7
  %v2007 = vsub.s32 %v2004, %v2006
  %v2008 = vrot.slane %v1665, %v2007
  %vm2009 = vcmask 982912
  %v2010 = vsel %vm2009, %v2008, %v2003
  %v2011 = vadd.s32 %v1908, 4294967176
  %v2012 = vlaneseq
  %v2013 = vshrl.u32 %v2012, 7
  %v2014 = vsub.s32 %v2011, %v2013
  %v2015 = vrot.slane %v1666, %v2014
  %vm2016 = vcmask 1048512
  %v2017 = vsel %vm2016, %v2015, %v2010
  %v2018 = vlaneseq
  %v2019 = vshrl.u32 %v2018, 7
  %v2020 = vsub.s32 %v1908, %v2019
  %v2021 = vrot.slane %v1667, %v2020
  %v2022 = vlaneseq
  %v2023 = vshrl.u32 %v2022, 7
  %v2024 = vsub.s32 %v1913, %v2023
  %v2025 = vrot.slane %v1668, %v2024
  %v2026 = vsel %vm1918, %v2025, %v2021
  %v2027 = vlaneseq
  %v2028 = vshrl.u32 %v2027, 7
  %v2029 = vsub.s32 %v1920, %v2028
  %v2030 = vrot.slane %v1669, %v2029
  %v2031 = vsel %vm1925, %v2030, %v2026
  %v2032 = vlaneseq
  %v2033 = vshrl.u32 %v2032, 7
  %v2034 = vsub.s32 %v1927, %v2033
  %v2035 = vrot.slane %v1670, %v2034
  %v2036 = vsel %vm1932, %v2035, %v2031
  %v2037 = vlaneseq
  %v2038 = vshrl.u32 %v2037, 7
  %v2039 = vsub.s32 %v1934, %v2038
  %v2040 = vrot.slane %v1671, %v2039
  %v2041 = vsel %vm1939, %v2040, %v2036
  %v2042 = vlaneseq
  %v2043 = vshrl.u32 %v2042, 7
  %v2044 = vsub.s32 %v1941, %v2043
  %v2045 = vrot.slane %v1672, %v2044
  %v2046 = vsel %vm1946, %v2045, %v2041
  %v2047 = vlaneseq
  %v2048 = vshrl.u32 %v2047, 7
  %v2049 = vsub.s32 %v1948, %v2048
  %v2050 = vrot.slane %v1673, %v2049
  %v2051 = vsel %vm1953, %v2050, %v2046
  %v2052 = vlaneseq
  %v2053 = vshrl.u32 %v2052, 7
  %v2054 = vsub.s32 %v1955, %v2053
  %v2055 = vrot.slane %v1674, %v2054
  %v2056 = vsel %vm1960, %v2055, %v2051
  %v2057 = vlaneseq
  %v2058 = vshrl.u32 %v2057, 7
  %v2059 = vsub.s32 %v1962, %v2058
  %v2060 = vrot.slane %v1675, %v2059
  %v2061 = vsel %vm1967, %v2060, %v2056
  %v2062 = vlaneseq
  %v2063 = vshrl.u32 %v2062, 7
  %v2064 = vsub.s32 %v1969, %v2063
  %v2065 = vrot.slane %v1676, %v2064
  %v2066 = vsel %vm1974, %v2065, %v2061
  %v2067 = vlaneseq
  %v2068 = vshrl.u32 %v2067, 7
  %v2069 = vsub.s32 %v1976, %v2068
  %v2070 = vrot.slane %v1677, %v2069
  %v2071 = vsel %vm1981, %v2070, %v2066
  %v2072 = vlaneseq
  %v2073 = vshrl.u32 %v2072, 7
  %v2074 = vsub.s32 %v1983, %v2073
  %v2075 = vrot.slane %v1678, %v2074
  %v2076 = vsel %vm1988, %v2075, %v2071
  %v2077 = vlaneseq
  %v2078 = vshrl.u32 %v2077, 7
  %v2079 = vsub.s32 %v1990, %v2078
  %v2080 = vrot.slane %v1679, %v2079
  %v2081 = vsel %vm1995, %v2080, %v2076
  %v2082 = vlaneseq
  %v2083 = vshrl.u32 %v2082, 7
  %v2084 = vsub.s32 %v1997, %v2083
  %v2085 = vrot.slane %v1680, %v2084
  %v2086 = vsel %vm2002, %v2085, %v2081
  %v2087 = vlaneseq
  %v2088 = vshrl.u32 %v2087, 7
  %v2089 = vsub.s32 %v2004, %v2088
  %v2090 = vrot.slane %v1681, %v2089
  %v2091 = vsel %vm2009, %v2090, %v2086
  %v2092 = vlaneseq
  %v2093 = vshrl.u32 %v2092, 7
  %v2094 = vsub.s32 %v2011, %v2093
  %v2095 = vrot.slane %v1682, %v2094
  %v2096 = vsel %vm2016, %v2095, %v2091
  %v2097 = vlaneseq
  %v2098 = vshrl.u32 %v2097, 7
  %v2099 = vsub.s32 %v1908, %v2098
  %v2100 = vrot.slane %v1683, %v2099
  %v2101 = vlaneseq
  %v2102 = vshrl.u32 %v2101, 7
  %v2103 = vsub.s32 %v1913, %v2102
  %v2104 = vrot.slane %v1684, %v2103
  %v2105 = vsel %vm1918, %v2104, %v2100
  %v2106 = vlaneseq
  %v2107 = vshrl.u32 %v2106, 7
  %v2108 = vsub.s32 %v1920, %v2107
  %v2109 = vrot.slane %v1685, %v2108
  %v2110 = vsel %vm1925, %v2109, %v2105
  %v2111 = vlaneseq
  %v2112 = vshrl.u32 %v2111, 7
  %v2113 = vsub.s32 %v1927, %v2112
  %v2114 = vrot.slane %v1686, %v2113
  %v2115 = vsel %vm1932, %v2114, %v2110
  %v2116 = vlaneseq
  %v2117 = vshrl.u32 %v2116, 7
  %v2118 = vsub.s32 %v1934, %v2117
  %v2119 = vrot.slane %v1687, %v2118
  %v2120 = vsel %vm1939, %v2119, %v2115
  %v2121 = vlaneseq
  %v2122 = vshrl.u32 %v2121, 7
  %v2123 = vsub.s32 %v1941, %v2122
  %v2124 = vrot.slane %v1688, %v2123
  %v2125 = vsel %vm1946, %v2124, %v2120
  %v2126 = vlaneseq
  %v2127 = vshrl.u32 %v2126, 7
  %v2128 = vsub.s32 %v1948, %v2127
  %v2129 = vrot.slane %v1689, %v2128
  %v2130 = vsel %vm1953, %v2129, %v2125
  %v2131 = vlaneseq
  %v2132 = vshrl.u32 %v2131, 7
  %v2133 = vsub.s32 %v1955, %v2132
  %v2134 = vrot.slane %v1690, %v2133
  %v2135 = vsel %vm1960, %v2134, %v2130
  %v2136 = vlaneseq
  %v2137 = vshrl.u32 %v2136, 7
  %v2138 = vsub.s32 %v1962, %v2137
  %v2139 = vrot.slane %v1691, %v2138
  %v2140 = vsel %vm1967, %v2139, %v2135
  %v2141 = vlaneseq
  %v2142 = vshrl.u32 %v2141, 7
  %v2143 = vsub.s32 %v1969, %v2142
  %v2144 = vrot.slane %v1692, %v2143
  %v2145 = vsel %vm1974, %v2144, %v2140
  %v2146 = vlaneseq
  %v2147 = vshrl.u32 %v2146, 7
  %v2148 = vsub.s32 %v1976, %v2147
  %v2149 = vrot.slane %v1693, %v2148
  %v2150 = vsel %vm1981, %v2149, %v2145
  %v2151 = vlaneseq
  %v2152 = vshrl.u32 %v2151, 7
  %v2153 = vsub.s32 %v1983, %v2152
  %v2154 = vrot.slane %v1694, %v2153
  %v2155 = vsel %vm1988, %v2154, %v2150
  %v2156 = vlaneseq
  %v2157 = vshrl.u32 %v2156, 7
  %v2158 = vsub.s32 %v1990, %v2157
  %v2159 = vrot.slane %v1695, %v2158
  %v2160 = vsel %vm1995, %v2159, %v2155
  %v2161 = vlaneseq
  %v2162 = vshrl.u32 %v2161, 7
  %v2163 = vsub.s32 %v1997, %v2162
  %v2164 = vrot.slane %v1696, %v2163
  %v2165 = vsel %vm2002, %v2164, %v2160
  %v2166 = vlaneseq
  %v2167 = vshrl.u32 %v2166, 7
  %v2168 = vsub.s32 %v2004, %v2167
  %v2169 = vrot.slane %v1697, %v2168
  %v2170 = vsel %vm2009, %v2169, %v2165
  %v2171 = vlaneseq
  %v2172 = vshrl.u32 %v2171, 7
  %v2173 = vsub.s32 %v2011, %v2172
  %v2174 = vrot.slane %v1698, %v2173
  %v2175 = vsel %vm2016, %v2174, %v2170
  %v2176 = vlaneseq
  %v2177 = vshrl.u32 %v2176, 7
  %v2178 = vsub.s32 %v1908, %v2177
  %v2179 = vrot.slane %v1699, %v2178
  %v2180 = vlaneseq
  %v2181 = vshrl.u32 %v2180, 7
  %v2182 = vsub.s32 %v1913, %v2181
  %v2183 = vrot.slane %v1700, %v2182
  %v2184 = vsel %vm1918, %v2183, %v2179
  %v2185 = vlaneseq
  %v2186 = vshrl.u32 %v2185, 7
  %v2187 = vsub.s32 %v1920, %v2186
  %v2188 = vrot.slane %v1701, %v2187
  %v2189 = vsel %vm1925, %v2188, %v2184
  %v2190 = vlaneseq
  %v2191 = vshrl.u32 %v2190, 7
  %v2192 = vsub.s32 %v1927, %v2191
  %v2193 = vrot.slane %v1702, %v2192
  %v2194 = vsel %vm1932, %v2193, %v2189
  %v2195 = vlaneseq
  %v2196 = vshrl.u32 %v2195, 7
  %v2197 = vsub.s32 %v1934, %v2196
  %v2198 = vrot.slane %v1703, %v2197
  %v2199 = vsel %vm1939, %v2198, %v2194
  %v2200 = vlaneseq
  %v2201 = vshrl.u32 %v2200, 7
  %v2202 = vsub.s32 %v1941, %v2201
  %v2203 = vrot.slane %v1704, %v2202
  %v2204 = vsel %vm1946, %v2203, %v2199
  %v2205 = vlaneseq
  %v2206 = vshrl.u32 %v2205, 7
  %v2207 = vsub.s32 %v1948, %v2206
  %v2208 = vrot.slane %v1705, %v2207
  %v2209 = vsel %vm1953, %v2208, %v2204
  %v2210 = vlaneseq
  %v2211 = vshrl.u32 %v2210, 7
  %v2212 = vsub.s32 %v1955, %v2211
  %v2213 = vrot.slane %v1706, %v2212
  %v2214 = vsel %vm1960, %v2213, %v2209
  %v2215 = vlaneseq
  %v2216 = vshrl.u32 %v2215, 7
  %v2217 = vsub.s32 %v1962, %v2216
  %v2218 = vrot.slane %v1707, %v2217
  %v2219 = vsel %vm1967, %v2218, %v2214
  %v2220 = vlaneseq
  %v2221 = vshrl.u32 %v2220, 7
  %v2222 = vsub.s32 %v1969, %v2221
  %v2223 = vrot.slane %v1708, %v2222
  %v2224 = vsel %vm1974, %v2223, %v2219
  %v2225 = vlaneseq
  %v2226 = vshrl.u32 %v2225, 7
  %v2227 = vsub.s32 %v1976, %v2226
  %v2228 = vrot.slane %v1709, %v2227
  %v2229 = vsel %vm1981, %v2228, %v2224
  %v2230 = vlaneseq
  %v2231 = vshrl.u32 %v2230, 7
  %v2232 = vsub.s32 %v1983, %v2231
  %v2233 = vrot.slane %v1710, %v2232
  %v2234 = vsel %vm1988, %v2233, %v2229
  %v2235 = vlaneseq
  %v2236 = vshrl.u32 %v2235, 7
  %v2237 = vsub.s32 %v1990, %v2236
  %v2238 = vrot.slane %v1711, %v2237
  %v2239 = vsel %vm1995, %v2238, %v2234
  %v2240 = vlaneseq
  %v2241 = vshrl.u32 %v2240, 7
  %v2242 = vsub.s32 %v1997, %v2241
  %v2243 = vrot.slane %v1712, %v2242
  %v2244 = vsel %vm2002, %v2243, %v2239
  %v2245 = vlaneseq
  %v2246 = vshrl.u32 %v2245, 7
  %v2247 = vsub.s32 %v2004, %v2246
  %v2248 = vrot.slane %v1713, %v2247
  %v2249 = vsel %vm2009, %v2248, %v2244
  %v2250 = vlaneseq
  %v2251 = vshrl.u32 %v2250, 7
  %v2252 = vsub.s32 %v2011, %v2251
  %v2253 = vrot.slane %v1714, %v2252
  %v2254 = vsel %vm2016, %v2253, %v2249
  %v2255 = vlaneseq
  %v2256 = vshrl.u32 %v2255, 7
  %v2257 = vsub.s32 %v1908, %v2256
  %v2258 = vrot.slane %v1715, %v2257
  %v2259 = vlaneseq
  %v2260 = vshrl.u32 %v2259, 7
  %v2261 = vsub.s32 %v1913, %v2260
  %v2262 = vrot.slane %v1716, %v2261
  %v2263 = vsel %vm1918, %v2262, %v2258
  %v2264 = vlaneseq
  %v2265 = vshrl.u32 %v2264, 7
  %v2266 = vsub.s32 %v1920, %v2265
  %v2267 = vrot.slane %v1717, %v2266
  %v2268 = vsel %vm1925, %v2267, %v2263
  %v2269 = vlaneseq
  %v2270 = vshrl.u32 %v2269, 7
  %v2271 = vsub.s32 %v1927, %v2270
  %v2272 = vrot.slane %v1718, %v2271
  %v2273 = vsel %vm1932, %v2272, %v2268
  %v2274 = vlaneseq
  %v2275 = vshrl.u32 %v2274, 7
  %v2276 = vsub.s32 %v1934, %v2275
  %v2277 = vrot.slane %v1719, %v2276
  %v2278 = vsel %vm1939, %v2277, %v2273
  %v2279 = vlaneseq
  %v2280 = vshrl.u32 %v2279, 7
  %v2281 = vsub.s32 %v1941, %v2280
  %v2282 = vrot.slane %v1720, %v2281
  %v2283 = vsel %vm1946, %v2282, %v2278
  %v2284 = vlaneseq
  %v2285 = vshrl.u32 %v2284, 7
  %v2286 = vsub.s32 %v1948, %v2285
  %v2287 = vrot.slane %v1721, %v2286
  %v2288 = vsel %vm1953, %v2287, %v2283
  %v2289 = vlaneseq
  %v2290 = vshrl.u32 %v2289, 7
  %v2291 = vsub.s32 %v1955, %v2290
  %v2292 = vrot.slane %v1722, %v2291
  %v2293 = vsel %vm1960, %v2292, %v2288
  %v2294 = vlaneseq
  %v2295 = vshrl.u32 %v2294, 7
  %v2296 = vsub.s32 %v1962, %v2295
  %v2297 = vrot.slane %v1723, %v2296
  %v2298 = vsel %vm1967, %v2297, %v2293
  %v2299 = vlaneseq
  %v2300 = vshrl.u32 %v2299, 7
  %v2301 = vsub.s32 %v1969, %v2300
  %v2302 = vrot.slane %v1724, %v2301
  %v2303 = vsel %vm1974, %v2302, %v2298
  %v2304 = vlaneseq
  %v2305 = vshrl.u32 %v2304, 7
  %v2306 = vsub.s32 %v1976, %v2305
  %v2307 = vrot.slane %v1725, %v2306
  %v2308 = vsel %vm1981, %v2307, %v2303
  %v2309 = vlaneseq
  %v2310 = vshrl.u32 %v2309, 7
  %v2311 = vsub.s32 %v1983, %v2310
  %v2312 = vrot.slane %v1726, %v2311
  %v2313 = vsel %vm1988, %v2312, %v2308
  %v2314 = vlaneseq
  %v2315 = vshrl.u32 %v2314, 7
  %v2316 = vsub.s32 %v1990, %v2315
  %v2317 = vrot.slane %v1727, %v2316
  %v2318 = vsel %vm1995, %v2317, %v2313
  %v2319 = vlaneseq
  %v2320 = vshrl.u32 %v2319, 7
  %v2321 = vsub.s32 %v1997, %v2320
  %v2322 = vrot.slane %v1728, %v2321
  %v2323 = vsel %vm2002, %v2322, %v2318
  %v2324 = vlaneseq
  %v2325 = vshrl.u32 %v2324, 7
  %v2326 = vsub.s32 %v2004, %v2325
  %v2327 = vrot.slane %v1729, %v2326
  %v2328 = vsel %vm2009, %v2327, %v2323
  %v2329 = vlaneseq
  %v2330 = vshrl.u32 %v2329, 7
  %v2331 = vsub.s32 %v2011, %v2330
  %v2332 = vrot.slane %v1730, %v2331
  %v2333 = vsel %vm2016, %v2332, %v2328
  %v2334 = vlaneseq
  %v2335 = vshrl.u32 %v2334, 7
  %v2336 = vsub.s32 %v1908, %v2335
  %v2337 = vrot.slane %v1731, %v2336
  %v2338 = vlaneseq
  %v2339 = vshrl.u32 %v2338, 7
  %v2340 = vsub.s32 %v1913, %v2339
  %v2341 = vrot.slane %v1732, %v2340
  %v2342 = vsel %vm1918, %v2341, %v2337
  %v2343 = vlaneseq
  %v2344 = vshrl.u32 %v2343, 7
  %v2345 = vsub.s32 %v1920, %v2344
  %v2346 = vrot.slane %v1733, %v2345
  %v2347 = vsel %vm1925, %v2346, %v2342
  %v2348 = vlaneseq
  %v2349 = vshrl.u32 %v2348, 7
  %v2350 = vsub.s32 %v1927, %v2349
  %v2351 = vrot.slane %v1734, %v2350
  %v2352 = vsel %vm1932, %v2351, %v2347
  %v2353 = vlaneseq
  %v2354 = vshrl.u32 %v2353, 7
  %v2355 = vsub.s32 %v1934, %v2354
  %v2356 = vrot.slane %v1735, %v2355
  %v2357 = vsel %vm1939, %v2356, %v2352
  %v2358 = vlaneseq
  %v2359 = vshrl.u32 %v2358, 7
  %v2360 = vsub.s32 %v1941, %v2359
  %v2361 = vrot.slane %v1736, %v2360
  %v2362 = vsel %vm1946, %v2361, %v2357
  %v2363 = vlaneseq
  %v2364 = vshrl.u32 %v2363, 7
  %v2365 = vsub.s32 %v1948, %v2364
  %v2366 = vrot.slane %v1737, %v2365
  %v2367 = vsel %vm1953, %v2366, %v2362
  %v2368 = vlaneseq
  %v2369 = vshrl.u32 %v2368, 7
  %v2370 = vsub.s32 %v1955, %v2369
  %v2371 = vrot.slane %v1738, %v2370
  %v2372 = vsel %vm1960, %v2371, %v2367
  %v2373 = vlaneseq
  %v2374 = vshrl.u32 %v2373, 7
  %v2375 = vsub.s32 %v1962, %v2374
  %v2376 = vrot.slane %v1739, %v2375
  %v2377 = vsel %vm1967, %v2376, %v2372
  %v2378 = vlaneseq
  %v2379 = vshrl.u32 %v2378, 7
  %v2380 = vsub.s32 %v1969, %v2379
  %v2381 = vrot.slane %v1740, %v2380
  %v2382 = vsel %vm1974, %v2381, %v2377
  %v2383 = vlaneseq
  %v2384 = vshrl.u32 %v2383, 7
  %v2385 = vsub.s32 %v1976, %v2384
  %v2386 = vrot.slane %v1741, %v2385
  %v2387 = vsel %vm1981, %v2386, %v2382
  %v2388 = vlaneseq
  %v2389 = vshrl.u32 %v2388, 7
  %v2390 = vsub.s32 %v1983, %v2389
  %v2391 = vrot.slane %v1742, %v2390
  %v2392 = vsel %vm1988, %v2391, %v2387
  %v2393 = vlaneseq
  %v2394 = vshrl.u32 %v2393, 7
  %v2395 = vsub.s32 %v1990, %v2394
  %v2396 = vrot.slane %v1743, %v2395
  %v2397 = vsel %vm1995, %v2396, %v2392
  %v2398 = vlaneseq
  %v2399 = vshrl.u32 %v2398, 7
  %v2400 = vsub.s32 %v1997, %v2399
  %v2401 = vrot.slane %v1744, %v2400
  %v2402 = vsel %vm2002, %v2401, %v2397
  %v2403 = vlaneseq
  %v2404 = vshrl.u32 %v2403, 7
  %v2405 = vsub.s32 %v2004, %v2404
  %v2406 = vrot.slane %v1745, %v2405
  %v2407 = vsel %vm2009, %v2406, %v2402
  %v2408 = vlaneseq
  %v2409 = vshrl.u32 %v2408, 7
  %v2410 = vsub.s32 %v2011, %v2409
  %v2411 = vrot.slane %v1746, %v2410
  %v2412 = vsel %vm2016, %v2411, %v2407
  %v2413 = vlaneseq
  %v2414 = vshrl.u32 %v2413, 7
  %v2415 = vsub.s32 %v1908, %v2414
  %v2416 = vrot.slane %v1747, %v2415
  %v2417 = vlaneseq
  %v2418 = vshrl.u32 %v2417, 7
  %v2419 = vsub.s32 %v1913, %v2418
  %v2420 = vrot.slane %v1748, %v2419
  %v2421 = vsel %vm1918, %v2420, %v2416
  %v2422 = vlaneseq
  %v2423 = vshrl.u32 %v2422, 7
  %v2424 = vsub.s32 %v1920, %v2423
  %v2425 = vrot.slane %v1749, %v2424
  %v2426 = vsel %vm1925, %v2425, %v2421
  %v2427 = vlaneseq
  %v2428 = vshrl.u32 %v2427, 7
  %v2429 = vsub.s32 %v1927, %v2428
  %v2430 = vrot.slane %v1750, %v2429
  %v2431 = vsel %vm1932, %v2430, %v2426
  %v2432 = vlaneseq
  %v2433 = vshrl.u32 %v2432, 7
  %v2434 = vsub.s32 %v1934, %v2433
  %v2435 = vrot.slane %v1751, %v2434
  %v2436 = vsel %vm1939, %v2435, %v2431
  %v2437 = vlaneseq
  %v2438 = vshrl.u32 %v2437, 7
  %v2439 = vsub.s32 %v1941, %v2438
  %v2440 = vrot.slane %v1752, %v2439
  %v2441 = vsel %vm1946, %v2440, %v2436
  %v2442 = vlaneseq
  %v2443 = vshrl.u32 %v2442, 7
  %v2444 = vsub.s32 %v1948, %v2443
  %v2445 = vrot.slane %v1753, %v2444
  %v2446 = vsel %vm1953, %v2445, %v2441
  %v2447 = vlaneseq
  %v2448 = vshrl.u32 %v2447, 7
  %v2449 = vsub.s32 %v1955, %v2448
  %v2450 = vrot.slane %v1754, %v2449
  %v2451 = vsel %vm1960, %v2450, %v2446
  %v2452 = vlaneseq
  %v2453 = vshrl.u32 %v2452, 7
  %v2454 = vsub.s32 %v1962, %v2453
  %v2455 = vrot.slane %v1755, %v2454
  %v2456 = vsel %vm1967, %v2455, %v2451
  %v2457 = vlaneseq
  %v2458 = vshrl.u32 %v2457, 7
  %v2459 = vsub.s32 %v1969, %v2458
  %v2460 = vrot.slane %v1756, %v2459
  %v2461 = vsel %vm1974, %v2460, %v2456
  %v2462 = vlaneseq
  %v2463 = vshrl.u32 %v2462, 7
  %v2464 = vsub.s32 %v1976, %v2463
  %v2465 = vrot.slane %v1757, %v2464
  %v2466 = vsel %vm1981, %v2465, %v2461
  %v2467 = vlaneseq
  %v2468 = vshrl.u32 %v2467, 7
  %v2469 = vsub.s32 %v1983, %v2468
  %v2470 = vrot.slane %v1758, %v2469
  %v2471 = vsel %vm1988, %v2470, %v2466
  %v2472 = vlaneseq
  %v2473 = vshrl.u32 %v2472, 7
  %v2474 = vsub.s32 %v1990, %v2473
  %v2475 = vrot.slane %v1759, %v2474
  %v2476 = vsel %vm1995, %v2475, %v2471
  %v2477 = vlaneseq
  %v2478 = vshrl.u32 %v2477, 7
  %v2479 = vsub.s32 %v1997, %v2478
  %v2480 = vrot.slane %v1760, %v2479
  %v2481 = vsel %vm2002, %v2480, %v2476
  %v2482 = vlaneseq
  %v2483 = vshrl.u32 %v2482, 7
  %v2484 = vsub.s32 %v2004, %v2483
  %v2485 = vrot.slane %v1761, %v2484
  %v2486 = vsel %vm2009, %v2485, %v2481
  %v2487 = vlaneseq
  %v2488 = vshrl.u32 %v2487, 7
  %v2489 = vsub.s32 %v2011, %v2488
  %v2490 = vrot.slane %v1762, %v2489
  %v2491 = vsel %vm2016, %v2490, %v2486
  %v2492 = vlaneseq
  %v2493 = vshrl.u32 %v2492, 7
  %v2494 = vsub.s32 %v1908, %v2493
  %v2495 = vrot.slane %v1763, %v2494
  %v2496 = vlaneseq
  %v2497 = vshrl.u32 %v2496, 7
  %v2498 = vsub.s32 %v1913, %v2497
  %v2499 = vrot.slane %v1764, %v2498
  %v2500 = vsel %vm1918, %v2499, %v2495
  %v2501 = vlaneseq
  %v2502 = vshrl.u32 %v2501, 7
  %v2503 = vsub.s32 %v1920, %v2502
  %v2504 = vrot.slane %v1765, %v2503
  %v2505 = vsel %vm1925, %v2504, %v2500
  %v2506 = vlaneseq
  %v2507 = vshrl.u32 %v2506, 7
  %v2508 = vsub.s32 %v1927, %v2507
  %v2509 = vrot.slane %v1766, %v2508
  %v2510 = vsel %vm1932, %v2509, %v2505
  %v2511 = vlaneseq
  %v2512 = vshrl.u32 %v2511, 7
  %v2513 = vsub.s32 %v1934, %v2512
  %v2514 = vrot.slane %v1767, %v2513
  %v2515 = vsel %vm1939, %v2514, %v2510
  %v2516 = vlaneseq
  %v2517 = vshrl.u32 %v2516, 7
  %v2518 = vsub.s32 %v1941, %v2517
  %v2519 = vrot.slane %v1768, %v2518
  %v2520 = vsel %vm1946, %v2519, %v2515
  %v2521 = vlaneseq
  %v2522 = vshrl.u32 %v2521, 7
  %v2523 = vsub.s32 %v1948, %v2522
  %v2524 = vrot.slane %v1769, %v2523
  %v2525 = vsel %vm1953, %v2524, %v2520
  %v2526 = vlaneseq
  %v2527 = vshrl.u32 %v2526, 7
  %v2528 = vsub.s32 %v1955, %v2527
  %v2529 = vrot.slane %v1770, %v2528
  %v2530 = vsel %vm1960, %v2529, %v2525
  %v2531 = vlaneseq
  %v2532 = vshrl.u32 %v2531, 7
  %v2533 = vsub.s32 %v1962, %v2532
  %v2534 = vrot.slane %v1771, %v2533
  %v2535 = vsel %vm1967, %v2534, %v2530
  %v2536 = vlaneseq
  %v2537 = vshrl.u32 %v2536, 7
  %v2538 = vsub.s32 %v1969, %v2537
  %v2539 = vrot.slane %v1772, %v2538
  %v2540 = vsel %vm1974, %v2539, %v2535
  %v2541 = vlaneseq
  %v2542 = vshrl.u32 %v2541, 7
  %v2543 = vsub.s32 %v1976, %v2542
  %v2544 = vrot.slane %v1773, %v2543
  %v2545 = vsel %vm1981, %v2544, %v2540
  %v2546 = vlaneseq
  %v2547 = vshrl.u32 %v2546, 7
  %v2548 = vsub.s32 %v1983, %v2547
  %v2549 = vrot.slane %v1774, %v2548
  %v2550 = vsel %vm1988, %v2549, %v2545
  %v2551 = vlaneseq
  %v2552 = vshrl.u32 %v2551, 7
  %v2553 = vsub.s32 %v1990, %v2552
  %v2554 = vrot.slane %v1775, %v2553
  %v2555 = vsel %vm1995, %v2554, %v2550
  %v2556 = vlaneseq
  %v2557 = vshrl.u32 %v2556, 7
  %v2558 = vsub.s32 %v1997, %v2557
  %v2559 = vrot.slane %v1776, %v2558
  %v2560 = vsel %vm2002, %v2559, %v2555
  %v2561 = vlaneseq
  %v2562 = vshrl.u32 %v2561, 7
  %v2563 = vsub.s32 %v2004, %v2562
  %v2564 = vrot.slane %v1777, %v2563
  %v2565 = vsel %vm2009, %v2564, %v2560
  %v2566 = vlaneseq
  %v2567 = vshrl.u32 %v2566, 7
  %v2568 = vsub.s32 %v2011, %v2567
  %v2569 = vrot.slane %v1778, %v2568
  %v2570 = vsel %vm2016, %v2569, %v2565
  %vm2571 = vcmask 1041409
  %v2572 = vsel %vm2571, %v2096, %v2017
  %vm2573 = vcmask 1042434
  %v2574 = vsel %vm2573, %v2175, %v2572
  %vm2575 = vcmask 1043459
  %v2576 = vsel %vm2575, %v2254, %v2574
  %vm2577 = vcmask 1044484
  %v2578 = vsel %vm2577, %v2333, %v2576
  %vm2579 = vcmask 1045509
  %v2580 = vsel %vm2579, %v2412, %v2578
  %vm2581 = vcmask 1046534
  %v2582 = vsel %vm2581, %v2491, %v2580
  %vm2583 = vcmask 1047559
  %v2584 = vsel %vm2583, %v2570, %v2582
  %v2586 = vmul.f32 %v148, %v2584
  %2587 = vadd.xlane.f32.xlu0 %v2586
  %v2588 = vpop.xlane.xlu0 %2587
  %v2589 = vmul.f32 %v148, %v17
  %2590 = vadd.xlane.f32.xlu0 %v2589
  %v2591 = vpop.xlane.xlu0 %2590
  %2592 = vadd.xlane.f32.xlu0 %v148
  %v2593 = vpop.xlane.xlu0 %2592
  %v2594 = vsub.f32 %v2588, %v2591
  %v2595 = vrcp.pop %v2593
  %v2596 = vmul.f32 %v2594, %v2595
  %vm2597 = vcmask 7168
  %2598 = vst.msk [vmem:[%s4] sm:$0xff] %vm2597, %v2596
  // Predicated region
  $region18: #{tpu_custom_call.1} parent=0 // pred_check
    _
  $region19: #{tpu_custom_call.1} parent=0 // pred_check_branch
    %2600 = sbr.rel (0) target = $region21
  $region20: #{tpu_custom_call.1} parent=0 // pred_region
    _
  $region21: #{tpu_custom_call.1} parent=0 // pred_fallthru
    _
  // Predicated region
  $region22: #{tpu_custom_call.1} parent=0 // pred_check
    _
  $region23: #{tpu_custom_call.1} parent=0 // pred_check_branch
    %2602 = sbr.rel (0) target = $region25
  $region24: #{tpu_custom_call.1} parent=0 // pred_region
    _
  $region25: #{tpu_custom_call.1} parent=0 // pred_fallthru
    _

</llo_original>
